<compile_context>
chip_gen: v6e
topology: v6e:2x2x1
jax: 0.10.0
libtpu: 0.0.40
codegen_flags: <defaults>
</compile_context>

<pallas_src>
import functools

import numpy as np

import jax
import jax.numpy as jnp
from jax.experimental import pallas as pl
from jax.experimental.pallas import tpu as pltpu


def _round_up(x, m):
    return (x + m - 1) // m * m


def _flipflop_catmod_kernel(x_ref, w_ref, b_ref, sel_ref, o_ref, *,
                            ntrans, ncat_out, out_size, group_bounds):
    """Fused linear + 5*tanh(transitions) + grouped log-softmax (cat-mod).

    All intermediate math runs on 128-lane-aligned vregs; only the final
    store is narrowed to the `out_size` real columns (lane-masked vst, no
    padding bytes ever hit HBM).
    """
    # ---- linear: MXU dot, f32 accumulate (operands optionally bf16) --------
    xv = x_ref[...].astype(w_ref.dtype)            # in-kernel cast: VPU, ~free
    y = jnp.dot(xv, w_ref[...], preferred_element_type=jnp.float32)
    y = y + b_ref[...]                             # (tile_m, feat_pad) f32

    # ---- transition scores straight from f32 y ------------------------------
    # (decoupled from the sel dot so the EUP tanh overlaps the epilogue MXU
    # pass, and transition precision is independent of the epilogue dtype).
    trans = 5.0 * jnp.tanh(y)

    # ---- epilogue dot: route cat-mod scores into the output column layout.
    # sel is an exact 0/1 matrix (no trans identity block); in bf16 mode only
    # y itself is rounded.
    sc = jnp.dot(y.astype(sel_ref.dtype), sel_ref[...],
                 preferred_element_type=jnp.float32)   # (tile_m, feat_pad)

    col = jax.lax.broadcasted_iota(jnp.int32, sc.shape, 1)   # one iota, reused
    is_trans = col < ntrans
    is_cat = jnp.logical_and(col >= ntrans, col < ntrans + ncat_out)

    # ---- per-group (per canonical base) log-softmax, matching the reference.
    # group_bounds is a tiny static tuple (ncan entries); the masked segment
    # max / sum reductions ride the XLU while the MXU/DMA are busy.
    gmasks = tuple(jnp.logical_and(col >= lo, col < hi)
                   for lo, hi in group_bounds)
    m_out = jnp.zeros_like(sc)
    for gm in gmasks:
        mg = jnp.max(jnp.where(gm, sc, -1e30), axis=-1, keepdims=True)
        m_out = jnp.where(gm, mg, m_out)
    z = jnp.where(is_cat, sc - m_out, 0.0)          # <= 0 on cat lanes, 0 else
    e = jnp.where(is_cat, jnp.exp(z), 0.0)          # never overflows / no inf
    den = jnp.ones_like(sc)                         # 1 off-group -> log() = 0
    for gm in gmasks:
        sg = jnp.sum(jnp.where(gm, e, 0.0), axis=-1, keepdims=True)
        den = jnp.where(gm, sg, den)                # >= 1 on cat lanes

    out = jnp.where(is_trans, trans, z - jnp.log(den))
    o_ref[...] = out[:, :out_size].astype(o_ref.dtype)


def _build_sel_matrix(ntrans, feat_pad, can_indices, dtype):
    """0/1 matrix routing raw cat-mod scores (linear-output columns
    ntrans .. ntrans+nmod) into the cat-mod output column layout, duplicating
    the shared canonical-base column once per canonical base.  Transition
    columns are NOT routed through it (taken directly from y)."""
    sel = np.zeros((feat_pad, feat_pad), dtype=np.float32)
    t = ntrans
    for idx in can_indices:
        for i in idx:
            sel[ntrans + int(i), t] = 1.0
            t += 1
    return jnp.asarray(sel, dtype=dtype)


def global_norm_flipflop_catmod(x, w, b, *, ntrans, nmod, can_indices,
                                tile_m=None, use_bf16_matmul=False,
                                out_dtype=jnp.float32):
    """Forward pass of GlobalNormFlipFlopCatMod.

    x: (T, B, insize) time-major (taiyaki convention); f32 or bf16.
    w: (insize, size)  (transpose of torch nn.Linear.weight), size=ntrans+1+nmod.
    b: (size,) bias.
    Returns (T, B, ntrans + ncan + nmod) in out_dtype (default f32).
    """
    T, B, insize = x.shape
    size = ntrans + 1 + nmod
    ncan = len(can_indices)
    ncat_out = ncan + nmod
    out_size = ntrans + ncat_out
    assert w.shape == (insize, size) and b.shape == (size,)

    M = T * B
    if tile_m is None:
        # Big row tiles amortise the ~0.35us per-grid-step overhead; keep the
        # grid >= 4 steps (when M allows) so both v7x TensorCores get >= 2
        # steps each and can still double-buffer their input/output DMAs.
        tile_m = max(8, min(1024, _round_up(pl.cdiv(M, 4), 8)))
    grid_m = pl.cdiv(M, tile_m)
    # NOTE: remainder blocks (M % tile_m != 0) compute on unspecified padded
    # rows; every op here is row-wise and those rows are never written back.

    # Single 128-lane-aligned feature width shared by the linear output and
    # the pre-slice epilogue: all in-kernel ops run on full vregs.  The
    # STORED output is unpadded (out_size columns).
    feat_pad = _round_up(max(size, out_size), 128)

    matmul_dtype = jnp.bfloat16 if use_bf16_matmul else jnp.float32

    x2d = x.reshape(M, insize)          # no dtype cast here (extra HBM pass)
    w_pad = jnp.pad(w.astype(jnp.float32),
                    ((0, 0), (0, feat_pad - size))).astype(matmul_dtype)
    b_pad = jnp.pad(b.astype(jnp.float32).reshape(1, size),
                    ((0, 0), (0, feat_pad - size)))
    sel = _build_sel_matrix(ntrans, feat_pad, can_indices, matmul_dtype)

    # Output-column span of each canonical base's log-softmax group.
    group_bounds, t = [], ntrans
    for idx in can_indices:
        group_bounds.append((t, t + len(idx)))
        t += len(idx)
    assert t == out_size
    group_bounds = tuple(group_bounds)

    kernel = functools.partial(
        _flipflop_catmod_kernel, ntrans=ntrans, ncat_out=ncat_out,
        out_size=out_size, group_bounds=group_bounds)

    out2d = pl.pallas_call(
        kernel,
        out_shape=jax.ShapeDtypeStruct((M, out_size), out_dtype),
        grid=(grid_m,),
        in_specs=[
            pl.BlockSpec((tile_m, insize), lambda i: (i, 0)),
            # Constant index_map -> fetched once, VMEM-resident across steps.
            pl.BlockSpec((insize, feat_pad), lambda i: (0, 0)),
            pl.BlockSpec((1, feat_pad), lambda i: (0, 0)),
            pl.BlockSpec((feat_pad, feat_pad), lambda i: (0, 0)),
        ],
        out_specs=pl.BlockSpec((tile_m, out_size), lambda i: (i, 0)),
        compiler_params=pltpu.CompilerParams(
            dimension_semantics=("parallel",),
            # Explicit limit: headroom for tile_m=1024 double-buffered blocks
            # even on v5e (16 MiB default scoped VMEM), within v7x's 64 MiB.
            vmem_limit_bytes=32 * 1024 * 1024),
    )(x2d, w_pad, b_pad, sel)

    return out2d.reshape(T, B, out_size)


def _reference_forward(x, w, b, *, ntrans, nmod, can_indices):
    """Pure-JAX mirror of GlobalNormFlipFlopCatMod.forward."""
    y = jnp.einsum('tbi,io->tbo', x, w,
                   precision=jax.lax.Precision.HIGHEST) + b
    trans = 5.0 * jnp.tanh(y[..., :ntrans])
    cat = y[..., ntrans:]
    assert cat.shape[-1] == nmod + 1
    outs = [trans]
    for idx in can_indices:
        outs.append(jax.nn.log_softmax(cat[..., jnp.asarray(idx)], axis=-1))
    return jnp.concatenate(outs, axis=-1)


if __name__ == "__main__":
    # Modified-base alphabet: canonical ACGT plus Y (mod of A) and Z (mod of
    # C): alphabet='ACGTZY', collapse='ACGTCA' -> cat-mod order A,Y,C,Z,G,T.
    alphabet, collapse_alphabet, can_bases = "ACGTZY", "ACGTCA", "ACGT"
    ncan = len(can_bases)
    nmod = len(alphabet) - ncan
    # Mirrors compute_layer_mods_info (static python, host side).
    can_nmods = [sum(b == cb for b in collapse_alphabet) - 1 for cb in can_bases]
    can_indices, curr = [], 0
    for nm in can_nmods:
        can_indices.append([0] + list(range(curr + 1, curr + 1 + nm)))
        curr += nm
    ntrans = 2 * ncan * (ncan + 1)        # 40 flip-flop transition scores
    size = ntrans + 1 + nmod              # 43 linear outputs
    out_size = ntrans + ncan + nmod       # 46 layer outputs

    T, B, insize = 16, 32, 128            # small, taiyaki time-major (T,B,F)
    key = jax.random.PRNGKey(0)
    kx, kw, kb = jax.random.split(key, 3)
    x = jax.random.normal(kx, (T, B, insize), dtype=jnp.float32)
    # TODO(synk): reset_parameters uses orthonormal / truncated-normal init;
    # that is host-side initialisation only, so plain Gaussians are used here.
    w = 0.1 * jax.random.normal(kw, (insize, size), dtype=jnp.float32)
    b = 0.1 * jax.random.normal(kb, (size,), dtype=jnp.float32)

    fwd = jax.jit(functools.partial(
        global_norm_flipflop_catmod,
        ntrans=ntrans, nmod=nmod, can_indices=can_indices))
    out = jax.block_until_ready(fwd(x, w, b))

    ref = _reference_forward(x, w, b, ntrans=ntrans, nmod=nmod,
                             can_indices=can_indices)
    assert out.shape == (T, B, out_size)
    assert jnp.allclose(out, ref, atol=2e-4, rtol=2e-4), float(
        jnp.max(jnp.abs(out - ref)))

    # bf16-MXU-operand variant (valid on v5e/v6e/v7x: bf16-native MXUs, all
    # non-matmul math stays f32).  Loose tolerance for bf16 rounding.
    fwd_bf16 = jax.jit(functools.partial(
        global_norm_flipflop_catmod,
        ntrans=ntrans, nmod=nmod, can_indices=can_indices,
        use_bf16_matmul=True))
    out_bf16 = jax.block_until_ready(fwd_bf16(x, w, b))
    assert out_bf16.shape == (T, B, out_size)
    assert jnp.allclose(out_bf16, ref, atol=0.25, rtol=0.05)

    print("KERNEL_OK")
</pallas_src>

<mosaic_0001>
module attributes {stable_mosaic.version = 11 : i64} {
  func.func @_flipflop_catmod_kernel(%arg0: i32, %arg1: memref<128x128xf32, #tpu.memory_space<vmem>>, %arg2: memref<128x128xf32, #tpu.memory_space<vmem>>, %arg3: memref<1x128xf32, #tpu.memory_space<vmem>>, %arg4: memref<128x128xf32, #tpu.memory_space<vmem>>, %arg5: memref<128x46xf32, #tpu.memory_space<vmem>>) attributes {dimension_semantics = [#tpu.dimension_semantics<parallel>], iteration_bounds = array<i64: 4>, scalar_prefetch = 0 : i64, scratch_operands = 0 : i64, tpu.core_type = #tpu.core_type<tc>, window_params = [{transform_indices = @transform_0, window_bounds = array<i64: 128, 128>}, {pipeline_mode = #tpu.pipeline_mode<synchronous>, transform_indices = @transform_1, window_bounds = array<i64: 128, 128>}, {pipeline_mode = #tpu.pipeline_mode<synchronous>, transform_indices = @transform_2, window_bounds = array<i64: 1, 128>}, {pipeline_mode = #tpu.pipeline_mode<synchronous>, transform_indices = @transform_3, window_bounds = array<i64: 128, 128>}, {transform_indices = @transform_4, window_bounds = array<i64: 128, 46>}]} {
    %c0 = arith.constant 0 : index
    %c0_0 = arith.constant 0 : index
    %0 = vector.load %arg1[%c0, %c0_0] : memref<128x128xf32, #tpu.memory_space<vmem>>, vector<128x128xf32>
    %c0_1 = arith.constant 0 : index
    %c0_2 = arith.constant 0 : index
    %1 = vector.load %arg2[%c0_1, %c0_2] : memref<128x128xf32, #tpu.memory_space<vmem>>, vector<128x128xf32>
    %cst = arith.constant dense<0.000000e+00> : vector<128x128xf32>
    %2 = tpu.matmul %0, %1, %cst {dimension_numbers = #tpu.dot_dimension_numbers<[1], [0], [0], [1], [0, 0, 1, 1], [], []>} : vector<128x128xf32>, vector<128x128xf32>, vector<128x128xf32> -> vector<128x128xf32>
    %c0_3 = arith.constant 0 : index
    %c0_4 = arith.constant 0 : index
    %3 = vector.load %arg3[%c0_3, %c0_4] : memref<1x128xf32, #tpu.memory_space<vmem>>, vector<1x128xf32>
    %4 = vector.broadcast %3 : vector<1x128xf32> to vector<128x128xf32>
    %5 = arith.addf %2, %4 : vector<128x128xf32>
    %6 = math.tanh %5 : vector<128x128xf32>
    %cst_5 = arith.constant 5.000000e+00 : f32
    %7 = vector.broadcast %cst_5 : f32 to vector<128x128xf32>
    %8 = arith.mulf %7, %6 : vector<128x128xf32>
    %c0_6 = arith.constant 0 : index
    %c0_7 = arith.constant 0 : index
    %9 = vector.load %arg4[%c0_6, %c0_7] : memref<128x128xf32, #tpu.memory_space<vmem>>, vector<128x128xf32>
    %cst_8 = arith.constant dense<0.000000e+00> : vector<128x128xf32>
    %10 = tpu.matmul %5, %9, %cst_8 {dimension_numbers = #tpu.dot_dimension_numbers<[1], [0], [0], [1], [0, 0, 1, 1], [], []>} : vector<128x128xf32>, vector<128x128xf32>, vector<128x128xf32> -> vector<128x128xf32>
    %11 = tpu.iota {dimensions = array<i32: 1>} : vector<128x128xi32>
    %c40_i32 = arith.constant 40 : i32
    %12 = vector.broadcast %c40_i32 : i32 to vector<128x128xi32>
    %13 = arith.cmpi slt, %11, %12 : vector<128x128xi32>
    %c40_i32_9 = arith.constant 40 : i32
    %14 = vector.broadcast %c40_i32_9 : i32 to vector<128x128xi32>
    %15 = arith.cmpi sge, %11, %14 : vector<128x128xi32>
    %c46_i32 = arith.constant 46 : i32
    %16 = vector.broadcast %c46_i32 : i32 to vector<128x128xi32>
    %17 = arith.cmpi slt, %11, %16 : vector<128x128xi32>
    %18 = arith.andi %15, %17 : vector<128x128xi1>
    %c40_i32_10 = arith.constant 40 : i32
    %19 = vector.broadcast %c40_i32_10 : i32 to vector<128x128xi32>
    %20 = arith.cmpi sge, %11, %19 : vector<128x128xi32>
    %c42_i32 = arith.constant 42 : i32
    %21 = vector.broadcast %c42_i32 : i32 to vector<128x128xi32>
    %22 = arith.cmpi slt, %11, %21 : vector<128x128xi32>
    %23 = arith.andi %20, %22 : vector<128x128xi1>
    %c42_i32_11 = arith.constant 42 : i32
    %24 = vector.broadcast %c42_i32_11 : i32 to vector<128x128xi32>
    %25 = arith.cmpi sge, %11, %24 : vector<128x128xi32>
    %c44_i32 = arith.constant 44 : i32
    %26 = vector.broadcast %c44_i32 : i32 to vector<128x128xi32>
    %27 = arith.cmpi slt, %11, %26 : vector<128x128xi32>
    %28 = arith.andi %25, %27 : vector<128x128xi1>
    %c44_i32_12 = arith.constant 44 : i32
    %29 = vector.broadcast %c44_i32_12 : i32 to vector<128x128xi32>
    %30 = arith.cmpi sge, %11, %29 : vector<128x128xi32>
    %c45_i32 = arith.constant 45 : i32
    %31 = vector.broadcast %c45_i32 : i32 to vector<128x128xi32>
    %32 = arith.cmpi slt, %11, %31 : vector<128x128xi32>
    %33 = arith.andi %30, %32 : vector<128x128xi1>
    %c45_i32_13 = arith.constant 45 : i32
    %34 = vector.broadcast %c45_i32_13 : i32 to vector<128x128xi32>
    %35 = arith.cmpi sge, %11, %34 : vector<128x128xi32>
    %c46_i32_14 = arith.constant 46 : i32
    %36 = vector.broadcast %c46_i32_14 : i32 to vector<128x128xi32>
    %37 = arith.cmpi slt, %11, %36 : vector<128x128xi32>
    %38 = arith.andi %35, %37 : vector<128x128xi1>
    %cst_15 = arith.constant 0.000000e+00 : f32
    %39 = vector.broadcast %cst_15 : f32 to vector<128x128xf32>
    %cst_16 = arith.constant -1.000000e+30 : f32
    %40 = vector.broadcast %cst_16 : f32 to vector<128x128xf32>
    %41 = arith.select %23, %10, %40 : vector<128x128xi1>, vector<128x128xf32>
    %cst_17 = arith.constant dense<0xFF800000> : vector<128xf32>
    %42 = vector.multi_reduction <maximumf>, %41, %cst_17 [1] : vector<128x128xf32> to vector<128xf32>
    %43 = vector.shape_cast %42 : vector<128xf32> to vector<128x1xf32>
    %44 = vector.shape_cast %43 : vector<128x1xf32> to vector<128x1xf32>
    %45 = vector.broadcast %44 : vector<128x1xf32> to vector<128x128xf32>
    %46 = arith.select %23, %45, %39 : vector<128x128xi1>, vector<128x128xf32>
    %cst_18 = arith.constant -1.000000e+30 : f32
    %47 = vector.broadcast %cst_18 : f32 to vector<128x128xf32>
    %48 = arith.select %28, %10, %47 : vector<128x128xi1>, vector<128x128xf32>
    %cst_19 = arith.constant dense<0xFF800000> : vector<128xf32>
    %49 = vector.multi_reduction <maximumf>, %48, %cst_19 [1] : vector<128x128xf32> to vector<128xf32>
    %50 = vector.shape_cast %49 : vector<128xf32> to vector<128x1xf32>
    %51 = vector.shape_cast %50 : vector<128x1xf32> to vector<128x1xf32>
    %52 = vector.broadcast %51 : vector<128x1xf32> to vector<128x128xf32>
    %53 = arith.select %28, %52, %46 : vector<128x128xi1>, vector<128x128xf32>
    %cst_20 = arith.constant -1.000000e+30 : f32
    %54 = vector.broadcast %cst_20 : f32 to vector<128x128xf32>
    %55 = arith.select %33, %10, %54 : vector<128x128xi1>, vector<128x128xf32>
    %cst_21 = arith.constant dense<0xFF800000> : vector<128xf32>
    %56 = vector.multi_reduction <maximumf>, %55, %cst_21 [1] : vector<128x128xf32> to vector<128xf32>
    %57 = vector.shape_cast %56 : vector<128xf32> to vector<128x1xf32>
    %58 = vector.shape_cast %57 : vector<128x1xf32> to vector<128x1xf32>
    %59 = vector.broadcast %58 : vector<128x1xf32> to vector<128x128xf32>
    %60 = arith.select %33, %59, %53 : vector<128x128xi1>, vector<128x128xf32>
    %cst_22 = arith.constant -1.000000e+30 : f32
    %61 = vector.broadcast %cst_22 : f32 to vector<128x128xf32>
    %62 = arith.select %38, %10, %61 : vector<128x128xi1>, vector<128x128xf32>
    %cst_23 = arith.constant dense<0xFF800000> : vector<128xf32>
    %63 = vector.multi_reduction <maximumf>, %62, %cst_23 [1] : vector<128x128xf32> to vector<128xf32>
    %64 = vector.shape_cast %63 : vector<128xf32> to vector<128x1xf32>
    %65 = vector.shape_cast %64 : vector<128x1xf32> to vector<128x1xf32>
    %66 = vector.broadcast %65 : vector<128x1xf32> to vector<128x128xf32>
    %67 = arith.select %38, %66, %60 : vector<128x128xi1>, vector<128x128xf32>
    %68 = arith.subf %10, %67 : vector<128x128xf32>
    %cst_24 = arith.constant 0.000000e+00 : f32
    %69 = vector.broadcast %cst_24 : f32 to vector<128x128xf32>
    %70 = arith.select %18, %68, %69 : vector<128x128xi1>, vector<128x128xf32>
    %71 = math.exp %70 : vector<128x128xf32>
    %cst_25 = arith.constant 0.000000e+00 : f32
    %72 = vector.broadcast %cst_25 : f32 to vector<128x128xf32>
    %73 = arith.select %18, %71, %72 : vector<128x128xi1>, vector<128x128xf32>
    %cst_26 = arith.constant 1.000000e+00 : f32
    %74 = vector.broadcast %cst_26 : f32 to vector<128x128xf32>
    %cst_27 = arith.constant 0.000000e+00 : f32
    %75 = vector.broadcast %cst_27 : f32 to vector<128x128xf32>
    %76 = arith.select %23, %73, %75 : vector<128x128xi1>, vector<128x128xf32>
    %cst_28 = arith.constant dense<0.000000e+00> : vector<128xf32>
    %77 = vector.multi_reduction <add>, %76, %cst_28 [1] : vector<128x128xf32> to vector<128xf32>
    %78 = vector.shape_cast %77 : vector<128xf32> to vector<128x1xf32>
    %79 = vector.shape_cast %78 : vector<128x1xf32> to vector<128x1xf32>
    %80 = vector.broadcast %79 : vector<128x1xf32> to vector<128x128xf32>
    %81 = arith.select %23, %80, %74 : vector<128x128xi1>, vector<128x128xf32>
    %cst_29 = arith.constant 0.000000e+00 : f32
    %82 = vector.broadcast %cst_29 : f32 to vector<128x128xf32>
    %83 = arith.select %28, %73, %82 : vector<128x128xi1>, vector<128x128xf32>
    %cst_30 = arith.constant dense<0.000000e+00> : vector<128xf32>
    %84 = vector.multi_reduction <add>, %83, %cst_30 [1] : vector<128x128xf32> to vector<128xf32>
    %85 = vector.shape_cast %84 : vector<128xf32> to vector<128x1xf32>
    %86 = vector.shape_cast %85 : vector<128x1xf32> to vector<128x1xf32>
    %87 = vector.broadcast %86 : vector<128x1xf32> to vector<128x128xf32>
    %88 = arith.select %28, %87, %81 : vector<128x128xi1>, vector<128x128xf32>
    %cst_31 = arith.constant 0.000000e+00 : f32
    %89 = vector.broadcast %cst_31 : f32 to vector<128x128xf32>
    %90 = arith.select %33, %73, %89 : vector<128x128xi1>, vector<128x128xf32>
    %cst_32 = arith.constant dense<0.000000e+00> : vector<128xf32>
    %91 = vector.multi_reduction <add>, %90, %cst_32 [1] : vector<128x128xf32> to vector<128xf32>
    %92 = vector.shape_cast %91 : vector<128xf32> to vector<128x1xf32>
    %93 = vector.shape_cast %92 : vector<128x1xf32> to vector<128x1xf32>
    %94 = vector.broadcast %93 : vector<128x1xf32> to vector<128x128xf32>
    %95 = arith.select %33, %94, %88 : vector<128x128xi1>, vector<128x128xf32>
    %cst_33 = arith.constant 0.000000e+00 : f32
    %96 = vector.broadcast %cst_33 : f32 to vector<128x128xf32>
    %97 = arith.select %38, %73, %96 : vector<128x128xi1>, vector<128x128xf32>
    %cst_34 = arith.constant dense<0.000000e+00> : vector<128xf32>
    %98 = vector.multi_reduction <add>, %97, %cst_34 [1] : vector<128x128xf32> to vector<128xf32>
    %99 = vector.shape_cast %98 : vector<128xf32> to vector<128x1xf32>
    %100 = vector.shape_cast %99 : vector<128x1xf32> to vector<128x1xf32>
    %101 = vector.broadcast %100 : vector<128x1xf32> to vector<128x128xf32>
    %102 = arith.select %38, %101, %95 : vector<128x128xi1>, vector<128x128xf32>
    %103 = math.log %102 : vector<128x128xf32>
    %104 = arith.subf %70, %103 : vector<128x128xf32>
    %105 = arith.select %13, %8, %104 : vector<128x128xi1>, vector<128x128xf32>
    %106 = vector.extract_strided_slice %105 {offsets = [0, 0], sizes = [128, 46], strides = [1, 1]} : vector<128x128xf32> to vector<128x46xf32>
    %c0_35 = arith.constant 0 : index
    %c0_36 = arith.constant 0 : index
    %107 = vector.load %arg5[%c0_35, %c0_36] : memref<128x46xf32, #tpu.memory_space<vmem>>, vector<128x46xf32>
    tpu.vector_store %arg5[%c0_35, %c0_36], %106 {strides = array<i32>} : memref<128x46xf32, #tpu.memory_space<vmem>>, vector<128x46xf32>,
    return
  }
  func.func @transform_0(%arg0: i32) -> (i32, i32) {
    %c0_i32 = arith.constant 0 : i32
    %c0_i32_0 = arith.constant 0 : i32
    return %arg0, %c0_i32 : i32, i32
  }
  func.func @transform_1(%arg0: i32) -> (i32, i32) {
    %c0_i32 = arith.constant 0 : i32
    %c0_i32_0 = arith.constant 0 : i32
    %c0_i32_1 = arith.constant 0 : i32
    return %c0_i32, %c0_i32_0 : i32, i32
  }
  func.func @transform_2(%arg0: i32) -> (i32, i32) {
    %c0_i32 = arith.constant 0 : i32
    %c0_i32_0 = arith.constant 0 : i32
    %c0_i32_1 = arith.constant 0 : i32
    return %c0_i32, %c0_i32_0 : i32, i32
  }
  func.func @transform_3(%arg0: i32) -> (i32, i32) {
    %c0_i32 = arith.constant 0 : i32
    %c0_i32_0 = arith.constant 0 : i32
    %c0_i32_1 = arith.constant 0 : i32
    return %c0_i32, %c0_i32_0 : i32, i32
  }
  func.func @transform_4(%arg0: i32) -> (i32, i32) {
    %c0_i32 = arith.constant 0 : i32
    %c0_i32_0 = arith.constant 0 : i32
    return %arg0, %c0_i32 : i32, i32
  }
}

</mosaic_0001>

<llo_original>
// kernel: global_norm_flipflop_catmod.1
$region0: #{global_norm_flipflop_catmod.1}
  #allocation0 [shape = 'u32[]', space=smem, size = 0x4, offset = 0x4, fixed_abs, tag = 'smem constant byte address 0x4 - core index']
  #allocation1 [shape = 'u32[144,128]{1,0:T(1,128)}', space=vmem, size = 0x12000, scoped, tag = 'internal scratch']
  %s0 = inlined_call_operand.hbm [shape: f32[512,128], index: 0, kind: input, shape index: {}]
  %s1 = inlined_call_operand.vmem [shape: f32[128,128], index: 1, kind: input, shape index: {}]
  %s2 = inlined_call_operand.vmem [shape: f32[1,128], index: 2, kind: input, shape index: {}]
  %s3 = inlined_call_operand.vmem [shape: f32[128,128], index: 3, kind: input, shape index: {}]
  %s4 = inlined_call_operand.hbm [shape: f32[512,46], index: 4, kind: output, shape index: {}]
  %s5 = sld [smem:[#allocation0]]
  $region53: #{global_norm_flipflop_catmod.1} parent=0
    _
  %s7 = ssub.s32 1, %s5
  %s8 = scalar_select 0, %s7, %s5
  $region1: #{global_norm_flipflop_catmod.1} parent=0
    #allocation2 [shape = 'u8[131072]{0}', space=vmem, size = 0x20000, scoped, tag = 'input window, operand 0']
    #allocation3 [shape = 's32[2]{0}', space=sflag, size = 0x8, scoped, tag = 'scoped memory for global_norm_flipflop_catmod.1']
    #allocation4 [shape = 's32[2]{0}', space=sflag, size = 0x8, scoped, tag = 'scoped memory for global_norm_flipflop_catmod.1']
    #allocation5 [shape = 'u8[131072]{0}', space=vmem, size = 0x20000, scoped, tag = 'output window, operand 0']
    %9 = vsyncpa [#allocation3], 0
    %s10 = scalar_lea.sflag [#allocation3], 1
    %11 = vsyncpa %s10, 0
    %12 = vsyncpa [#allocation4], 0
    %s13 = scalar_lea.sflag [#allocation4], 1
    %14 = vsyncpa %s13, 0
    loop: start=0, step=1, limit=6
    $region2: #{global_norm_flipflop_catmod.1} parent=1 // loop_pre_header
      _
    $region3: #{global_norm_flipflop_catmod.1} parent=1 // loop_header
      %s16 = sphi 0, %s20
      %p17 = scmp.ge.s32.totalorder %s16, 6
      %s26 = sphi 0, %s28
      %s29 = sphi 0, %s26
      %s30 = sphi 0, %s29
      %s46 = sphi 0, %s30
      %s50 = sphi 0, %s50
      %s52 = sphi 0, %s50
      %s53 = sphi 0, %s52
      %s67 = sphi 0, %s53
      %s71 = sphi 0, %s71
      %s73 = sphi 0, %s71
      %s74 = sphi 0, %s73
      %s88 = sphi 0, %s74
      %s92 = sphi 0, %s92
      %s94 = sphi 0, %s92
      %s95 = sphi 0, %s94
      %s109 = sphi 0, %s95
      %s115 = sphi 0, %s117
      %s118 = sphi 0, %s115
      %s119 = sphi 0, %s118
      %s135 = sphi 0, %s119
    $region4: #{global_norm_flipflop_catmod.1} parent=1 // loop_header_branch
      %19 = sbr.rel (%p17) target = $region8
    $region5: #{global_norm_flipflop_catmod.1} parent=1 // loop_body
      %s21 = ssub.s32 %s16, 1
      %s22 = ssub.s32 %s16, 2
      %s23 = sadd.s32 %s16, 1
      %s24 = ssub.s32 %s16, %s23
      %p25 = scmp.eq.s32.totalorder %s24, 0
      %s27 = sadd.s32 %s26, 1
      %s28 = scalar_select %p25, %s26, %s27
      %p31 = pneg %p25
      %p32 = scmp.eq.s32.totalorder %s16, 3
      %p33 = por %p31, %p32
      %p34 = scmp.ne.s32.totalorder %s26, %s29
      %p35 = scmp.eq.s32.totalorder %s16, 0
      %p36 = por %p34, %p35
      %p37 = scmp.ne.s32.totalorder %s26, %s29
      %p38 = scmp.eq.s32.totalorder %s21, 3
      %p39 = por %p37, %p38
      %p40 = scmp.ne.s32.totalorder %s29, %s30
      %p41 = scmp.eq.s32.totalorder %s21, 0
      %p42 = por %p40, %p41
      %p43 = scmp.ne.s32.totalorder %s29, %s30
      %p44 = scmp.eq.s32.totalorder %s22, 3
      %p45 = por %p43, %p44
      %p47 = scmp.ne.s32.totalorder %s30, %s46
      %p48 = scmp.eq.s32.totalorder %s22, 0
      %p49 = por %p47, %p48
      %s51 = sadd.s32 %s50, 1
      %p54 = scmp.eq.s32.totalorder %s16, 3
      %p55 = scmp.ne.s32.totalorder %s50, %s52
      %p56 = scmp.eq.s32.totalorder %s16, 0
      %p57 = por %p55, %p56
      %p58 = scmp.ne.s32.totalorder %s50, %s52
      %p59 = scmp.eq.s32.totalorder %s21, 3
      %p60 = por %p58, %p59
      %p61 = scmp.ne.s32.totalorder %s52, %s53
      %p62 = scmp.eq.s32.totalorder %s21, 0
      %p63 = por %p61, %p62
      %p64 = scmp.ne.s32.totalorder %s52, %s53
      %p65 = scmp.eq.s32.totalorder %s22, 3
      %p66 = por %p64, %p65
      %p68 = scmp.ne.s32.totalorder %s53, %s67
      %p69 = scmp.eq.s32.totalorder %s22, 0
      %p70 = por %p68, %p69
      %s72 = sadd.s32 %s71, 1
      %p75 = scmp.eq.s32.totalorder %s16, 3
      %p76 = scmp.ne.s32.totalorder %s71, %s73
      %p77 = scmp.eq.s32.totalorder %s16, 0
      %p78 = por %p76, %p77
      %p79 = scmp.ne.s32.totalorder %s71, %s73
      %p80 = scmp.eq.s32.totalorder %s21, 3
      %p81 = por %p79, %p80
      %p82 = scmp.ne.s32.totalorder %s73, %s74
      %p83 = scmp.eq.s32.totalorder %s21, 0
      %p84 = por %p82, %p83
      %p85 = scmp.ne.s32.totalorder %s73, %s74
      %p86 = scmp.eq.s32.totalorder %s22, 3
      %p87 = por %p85, %p86
      %p89 = scmp.ne.s32.totalorder %s74, %s88
      %p90 = scmp.eq.s32.totalorder %s22, 0
      %p91 = por %p89, %p90
      %s93 = sadd.s32 %s92, 1
      %p96 = scmp.eq.s32.totalorder %s16, 3
      %p97 = scmp.ne.s32.totalorder %s92, %s94
      %p98 = scmp.eq.s32.totalorder %s16, 0
      %p99 = por %p97, %p98
      %p100 = scmp.ne.s32.totalorder %s92, %s94
      %p101 = scmp.eq.s32.totalorder %s21, 3
      %p102 = por %p100, %p101
      %p103 = scmp.ne.s32.totalorder %s94, %s95
      %p104 = scmp.eq.s32.totalorder %s21, 0
      %p105 = por %p103, %p104
      %p106 = scmp.ne.s32.totalorder %s94, %s95
      %p107 = scmp.eq.s32.totalorder %s22, 3
      %p108 = por %p106, %p107
      %p110 = scmp.ne.s32.totalorder %s95, %s109
      %p111 = scmp.eq.s32.totalorder %s22, 0
      %p112 = por %p110, %p111
      %s113 = ssub.s32 %s16, %s23
      %p114 = scmp.eq.s32.totalorder %s113, 0
      %s116 = sadd.s32 %s115, 1
      %s117 = scalar_select %p114, %s115, %s116
      %p120 = pneg %p114
      %p121 = scmp.eq.s32.totalorder %s16, 3
      %p122 = por %p120, %p121
      %p123 = scmp.ne.s32.totalorder %s115, %s118
      %p124 = scmp.eq.s32.totalorder %s16, 0
      %p125 = por %p123, %p124
      %p126 = scmp.ne.s32.totalorder %s115, %s118
      %p127 = scmp.eq.s32.totalorder %s21, 3
      %p128 = por %p126, %p127
      %p129 = scmp.ne.s32.totalorder %s118, %s119
      %p130 = scmp.eq.s32.totalorder %s21, 0
      %p131 = por %p129, %p130
      %p132 = scmp.ne.s32.totalorder %s118, %s119
      %p133 = scmp.eq.s32.totalorder %s22, 3
      %p134 = por %p132, %p133
      %p136 = scmp.ne.s32.totalorder %s119, %s135
      %p137 = scmp.eq.s32.totalorder %s22, 0
      %p138 = por %p136, %p137
      %p139 = scmp.le.s32.totalorder 1, %s16
      %p140 = scmp.lt.s32.totalorder %s16, 5
      %p141 = pnand %p139, %p140
      %p142 = pneg %p141
      // Predicated region
      $region9: #{global_norm_flipflop_catmod.1} parent=5 // pred_check
        _
      $region10: #{global_norm_flipflop_catmod.1} parent=5 // pred_check_branch
        %144 = sbr.rel (%p141) target = $region12
      $region11: #{global_norm_flipflop_catmod.1} parent=5 // pred_region
        %s145 = ssub.s32 %s16, 1
        // Predicated region
        $region13: #{global_norm_flipflop_catmod.1} parent=11 // pred_check
          %p146 = pneg %p63
        $region14: #{global_norm_flipflop_catmod.1} parent=11 // pred_check_branch
          %148 = sbr.rel (%p146) target = $region16
        $region15: #{global_norm_flipflop_catmod.1} parent=11 // pred_region
          _
        $region16: #{global_norm_flipflop_catmod.1} parent=11 // pred_fallthru
          _
        // Predicated region
        $region17: #{global_norm_flipflop_catmod.1} parent=11 // pred_check
          %p149 = pneg %p84
        $region18: #{global_norm_flipflop_catmod.1} parent=11 // pred_check_branch
          %151 = sbr.rel (%p149) target = $region20
        $region19: #{global_norm_flipflop_catmod.1} parent=11 // pred_region
          _
        $region20: #{global_norm_flipflop_catmod.1} parent=11 // pred_fallthru
          _
        // Predicated region
        $region21: #{global_norm_flipflop_catmod.1} parent=11 // pred_check
          %p152 = pneg %p105
        $region22: #{global_norm_flipflop_catmod.1} parent=11 // pred_check_branch
          %154 = sbr.rel (%p152) target = $region24
        $region23: #{global_norm_flipflop_catmod.1} parent=11 // pred_region
          _
        $region24: #{global_norm_flipflop_catmod.1} parent=11 // pred_fallthru
          _
      $region12: #{global_norm_flipflop_catmod.1} parent=5 // pred_fallthru
        _
      %p155 = scmp.lt.s32.totalorder %s16, 4
      // Predicated region
      $region25: #{global_norm_flipflop_catmod.1} parent=5 // pred_check
        %p156 = pneg %p155
      $region26: #{global_norm_flipflop_catmod.1} parent=5 // pred_check_branch
        %158 = sbr.rel (%p156) target = $region28
      $region27: #{global_norm_flipflop_catmod.1} parent=5 // pred_region
        // Predicated region
        $region29: #{global_norm_flipflop_catmod.1} parent=27 // pred_check
          %p159 = pneg %p36
        $region30: #{global_norm_flipflop_catmod.1} parent=27 // pred_check_branch
          %161 = sbr.rel (%p159) target = $region32
        $region31: #{global_norm_flipflop_catmod.1} parent=27 // pred_region
          %s162 = sand.u32 %s26, 1
          %s163 = scalar_lea.sflag [#allocation3], %s162
          %s164 = sand.u32 %s26, 1
          %s165 = smul.addr %s164, 128
          %s166 = scalar_lea.vmem [#allocation2], %s165
          %s167 = smul.u32 16, %s16
          %s169 = ssub.s32 2048, 2048
          %170 = vsyncadd %s163, %s169
          %s171 = smul.addr %s167, 128
          %s172 = scalar_lea.hbm %s0, %s171
          %s173 = sshll.u32 %s166, 4
          %s174 = int_to_ptr.vmem [resolvable:$true] %s173
          %179 = dma.hbm_to_vmem [thread:$0]  %s172, 2048, %s174, %s163, 128, 128, 8
        $region32: #{global_norm_flipflop_catmod.1} parent=27 // pred_fallthru
          _
      $region28: #{global_norm_flipflop_catmod.1} parent=5 // pred_fallthru
        _
      %p180 = scmp.le.s32.totalorder 1, %s16
      %p181 = scmp.lt.s32.totalorder %s16, 5
      %p182 = pnand %p180, %p181
      %p183 = pneg %p182
      // Predicated region
      $region33: #{global_norm_flipflop_catmod.1} parent=5 // pred_check
        _
      $region34: #{global_norm_flipflop_catmod.1} parent=5 // pred_check_branch
        %185 = sbr.rel (%p182) target = $region36
      $region35: #{global_norm_flipflop_catmod.1} parent=5 // pred_region
        %s186 = ssub.s32 %s16, 1
        %s187 = sand.u32 %s29, 1
        %s188 = scalar_lea.sflag [#allocation3], %s187
        %s189 = sand.u32 %s29, 1
        %s190 = smul.addr %s189, 128
        %s191 = scalar_lea.vmem [#allocation2], %s190
        // Predicated region
        $region37: #{global_norm_flipflop_catmod.1} parent=35 // pred_check
          %p192 = pneg %p42
        $region38: #{global_norm_flipflop_catmod.1} parent=35 // pred_check_branch
          %194 = sbr.rel (%p192) target = $region40
        $region39: #{global_norm_flipflop_catmod.1} parent=35 // pred_region
          %195 = dma.done %s188, 2048
        $region40: #{global_norm_flipflop_catmod.1} parent=35 // pred_fallthru
          _
        %s196 = sand.u32 %s29, 1
        %s197 = scalar_lea.sflag [#allocation3], %s196
        %s198 = sand.u32 %s29, 1
        %s199 = smul.addr %s198, 128
        %s200 = scalar_lea.vmem [#allocation2], %s199
        %p201 = pneg %p42
        %p202 = pneg %p39
        %p203 = pneg %p63
        %p204 = pneg %p60
        %p205 = pneg %p84
        %p206 = pneg %p81
        %p207 = pneg %p105
        %p208 = pneg %p102
        %p209 = pneg %p131
        %p210 = pneg %p128
        %s211 = sand.u32 %s118, 1
        %s212 = scalar_lea.sflag [#allocation4], %s211
        %s213 = sand.u32 %s118, 1
        %s214 = smul.addr %s213, 128
        %s215 = scalar_lea.vmem [#allocation5], %s214
        %s216 = smul.u32 16, %s21
        %s217 = smul.u32 16, %s21
        %v218 = vld [vmem:[%s191] sm:$0xff]
        %v219 = vld [vmem:[%s191 + $0x8] sm:$0xff]
        %v220 = vld [vmem:[%s191 + $0x10] sm:$0xff]
        %v221 = vld [vmem:[%s191 + $0x18] sm:$0xff]
        %v222 = vld [vmem:[%s191 + $0x20] sm:$0xff]
        %v223 = vld [vmem:[%s191 + $0x28] sm:$0xff]
        %v224 = vld [vmem:[%s191 + $0x30] sm:$0xff]
        %v225 = vld [vmem:[%s191 + $0x38] sm:$0xff]
        %v226 = vld [vmem:[%s191 + $0x40] sm:$0xff]
        %v227 = vld [vmem:[%s191 + $0x48] sm:$0xff]
        %v228 = vld [vmem:[%s191 + $0x50] sm:$0xff]
        %v229 = vld [vmem:[%s191 + $0x58] sm:$0xff]
        %v230 = vld [vmem:[%s191 + $0x60] sm:$0xff]
        %v231 = vld [vmem:[%s191 + $0x68] sm:$0xff]
        %v232 = vld [vmem:[%s191 + $0x70] sm:$0xff]
        %v233 = vld [vmem:[%s191 + $0x78] sm:$0xff]
        %v234 = vld [vmem:[%s1] sm:$0xff]
        %v235 = vld [vmem:[%s1 + $0x8] sm:$0xff]
        %v236 = vld [vmem:[%s1 + $0x10] sm:$0xff]
        %v237 = vld [vmem:[%s1 + $0x18] sm:$0xff]
        %v238 = vld [vmem:[%s1 + $0x20] sm:$0xff]
        %v239 = vld [vmem:[%s1 + $0x28] sm:$0xff]
        %v240 = vld [vmem:[%s1 + $0x30] sm:$0xff]
        %v241 = vld [vmem:[%s1 + $0x38] sm:$0xff]
        %v242 = vld [vmem:[%s1 + $0x40] sm:$0xff]
        %v243 = vld [vmem:[%s1 + $0x48] sm:$0xff]
        %v244 = vld [vmem:[%s1 + $0x50] sm:$0xff]
        %v245 = vld [vmem:[%s1 + $0x58] sm:$0xff]
        %v246 = vld [vmem:[%s1 + $0x60] sm:$0xff]
        %v247 = vld [vmem:[%s1 + $0x68] sm:$0xff]
        %v248 = vld [vmem:[%s1 + $0x70] sm:$0xff]
        %v249 = vld [vmem:[%s1 + $0x78] sm:$0xff]
        %v250 = vld [vmem:[%s2] sm:$0x1]
        %v252 = vlaneseq
        %v253 = vshrl.u32 %v252, 7
        %v254 = vsub.s32 0, %v253
        %v255 = vrot.slane %v250, %v254
        %257 = vmatprep.subr.mxu0 0.0
        %258 = vmatpush1.msra.mxu0 %v249
        %259 = vmatprep.subr.mxu0 0.0
        %260 = vmatpush1.msra.mxu0 %v248
        %261 = vmatprep.subr.mxu0 0.0
        %262 = vmatpush1.msra.mxu0 %v247
        %263 = vmatprep.subr.mxu0 0.0
        %264 = vmatpush1.msra.mxu0 %v246
        %265 = vmatprep.subr.mxu0 0.0
        %266 = vmatpush1.msra.mxu0 %v245
        %267 = vmatprep.subr.mxu0 0.0
        %268 = vmatpush1.msra.mxu0 %v244
        %269 = vmatprep.subr.mxu0 0.0
        %270 = vmatpush1.msra.mxu0 %v243
        %271 = vmatprep.subr.mxu0 0.0
        %272 = vmatpush1.msra.mxu0 %v242
        %273 = vmatprep.subr.mxu0 0.0
        %274 = vmatpush1.msra.mxu0 %v241
        %275 = vmatprep.subr.mxu0 0.0
        %276 = vmatpush1.msra.mxu0 %v240
        %277 = vmatprep.subr.mxu0 0.0
        %278 = vmatpush1.msra.mxu0 %v239
        %279 = vmatprep.subr.mxu0 0.0
        %280 = vmatpush1.msra.mxu0 %v238
        %281 = vmatprep.subr.mxu0 0.0
        %282 = vmatpush1.msra.mxu0 %v237
        %283 = vmatprep.subr.mxu0 0.0
        %284 = vmatpush1.msra.mxu0 %v236
        %285 = vmatprep.subr.mxu0 0.0
        %286 = vmatpush1.msra.mxu0 %v235
        %287 = vmatprep.subr.mxu0 0.0
        %288 = vmatpush1.msra.mxu0 %v234
        %289 = vmatprep.subr.mxu0 0.0
        %290 = vmatpush2.msra.mxu0 0.0
        %291 = vmatprep.subr.mxu0 0.0
        %292 = vmatpush2.msra.mxu0 0.0
        %293 = vmatprep.subr.mxu0 0.0
        %294 = vmatpush2.msra.mxu0 0.0
        %295 = vmatprep.subr.mxu0 0.0
        %296 = vmatpush2.msra.mxu0 0.0
        %297 = vmatprep.subr.mxu0 0.0
        %298 = vmatpush2.msra.mxu0 0.0
        %299 = vmatprep.subr.mxu0 0.0
        %300 = vmatpush2.msra.mxu0 0.0
        %301 = vmatprep.subr.mxu0 0.0
        %302 = vmatpush2.msra.mxu0 0.0
        %303 = vmatprep.subr.mxu0 0.0
        %304 = vmatpush2.msra.mxu0 0.0
        %305 = vmatprep.subr.mxu0 0.0
        %306 = vmatpush2.msra.mxu0 0.0
        %307 = vmatprep.subr.mxu0 0.0
        %308 = vmatpush2.msra.mxu0 0.0
        %309 = vmatprep.subr.mxu0 0.0
        %310 = vmatpush2.msra.mxu0 0.0
        %311 = vmatprep.subr.mxu0 0.0
        %312 = vmatpush2.msra.mxu0 0.0
        %313 = vmatprep.subr.mxu0 0.0
        %314 = vmatpush2.msra.mxu0 0.0
        %315 = vmatprep.subr.mxu0 0.0
        %316 = vmatpush2.msra.mxu0 0.0
        %317 = vmatprep.subr.mxu0 0.0
        %318 = vmatpush2.msra.mxu0 0.0
        %319 = vmatprep.subr.mxu0 0.0
        %320 = vmatpush2.msra.mxu0 0.0
        %321 = vmatprep.mubr.f32.mxu0 0.0
        %322 = vmatmul.mubr.f32.gmra.mxu0 %v218
        %v323 = vpop.f32.mrf.mxu0
        %v324 = vadd.f32 %v255, %v323
        %v325 = vpop.f32.mrf.mxu0
        %326 = vmatprep.mubr.f32.mxu0 0.0
        %327 = vmatmul.mubr.f32.gmra.mxu0 %v219
        %v328 = vpop.f32.mrf.mxu0
        %v329 = vadd.f32 %v255, %v328
        %v330 = vpop.f32.mrf.mxu0
        %331 = vmatprep.mubr.f32.mxu0 0.0
        %332 = vmatmul.mubr.f32.gmra.mxu0 %v220
        %v333 = vpop.f32.mrf.mxu0
        %v334 = vadd.f32 %v255, %v333
        %v335 = vpop.f32.mrf.mxu0
        %336 = vmatprep.mubr.f32.mxu0 0.0
        %337 = vmatmul.mubr.f32.gmra.mxu0 %v221
        %v338 = vpop.f32.mrf.mxu0
        %v339 = vadd.f32 %v255, %v338
        %v340 = vpop.f32.mrf.mxu0
        %341 = vmatprep.mubr.f32.mxu0 0.0
        %342 = vmatmul.mubr.f32.gmra.mxu0 %v222
        %v343 = vpop.f32.mrf.mxu0
        %v344 = vadd.f32 %v255, %v343
        %v345 = vpop.f32.mrf.mxu0
        %346 = vmatprep.mubr.f32.mxu0 0.0
        %347 = vmatmul.mubr.f32.gmra.mxu0 %v223
        %v348 = vpop.f32.mrf.mxu0
        %v349 = vadd.f32 %v255, %v348
        %v350 = vpop.f32.mrf.mxu0
        %351 = vmatprep.mubr.f32.mxu0 0.0
        %352 = vmatmul.mubr.f32.gmra.mxu0 %v224
        %v353 = vpop.f32.mrf.mxu0
        %v354 = vadd.f32 %v255, %v353
        %v355 = vpop.f32.mrf.mxu0
        %356 = vmatprep.mubr.f32.mxu0 0.0
        %357 = vmatmul.mubr.f32.gmra.mxu0 %v225
        %v358 = vpop.f32.mrf.mxu0
        %v359 = vadd.f32 %v255, %v358
        %v360 = vpop.f32.mrf.mxu0
        %361 = vmatprep.mubr.f32.mxu0 0.0
        %362 = vmatmul.mubr.f32.gmra.mxu0 %v226
        %v363 = vpop.f32.mrf.mxu0
        %v364 = vadd.f32 %v255, %v363
        %v365 = vpop.f32.mrf.mxu0
        %366 = vmatprep.mubr.f32.mxu0 0.0
        %367 = vmatmul.mubr.f32.gmra.mxu0 %v227
        %v368 = vpop.f32.mrf.mxu0
        %v369 = vadd.f32 %v255, %v368
        %v370 = vpop.f32.mrf.mxu0
        %371 = vmatprep.mubr.f32.mxu0 0.0
        %372 = vmatmul.mubr.f32.gmra.mxu0 %v228
        %v373 = vpop.f32.mrf.mxu0
        %v374 = vadd.f32 %v255, %v373
        %v375 = vpop.f32.mrf.mxu0
        %376 = vmatprep.mubr.f32.mxu0 0.0
        %377 = vmatmul.mubr.f32.gmra.mxu0 %v229
        %v378 = vpop.f32.mrf.mxu0
        %v379 = vadd.f32 %v255, %v378
        %v380 = vpop.f32.mrf.mxu0
        %381 = vmatprep.mubr.f32.mxu0 0.0
        %382 = vmatmul.mubr.f32.gmra.mxu0 %v230
        %v383 = vpop.f32.mrf.mxu0
        %v384 = vadd.f32 %v255, %v383
        %v385 = vpop.f32.mrf.mxu0
        %386 = vmatprep.mubr.f32.mxu0 0.0
        %387 = vmatmul.mubr.f32.gmra.mxu0 %v231
        %v388 = vpop.f32.mrf.mxu0
        %v389 = vadd.f32 %v255, %v388
        %v390 = vpop.f32.mrf.mxu0
        %391 = vmatprep.mubr.f32.mxu0 0.0
        %392 = vmatmul.mubr.f32.gmra.mxu0 %v232
        %v393 = vpop.f32.mrf.mxu0
        %v394 = vadd.f32 %v255, %v393
        %v395 = vpop.f32.mrf.mxu0
        %396 = vmatprep.mubr.f32.mxu0 0.0
        %397 = vmatmul.mubr.f32.gmra.mxu0 %v233
        %v398 = vpop.f32.mrf.mxu0
        %v399 = vadd.f32 %v255, %v398
        %v400 = vpop.f32.mrf.mxu0
        %401 = vdwg.mxu0
        %v402 = vtanh.pop %v324
        %v403 = vtanh.pop %v329
        %v404 = vtanh.pop %v334
        %v405 = vtanh.pop %v339
        %v406 = vtanh.pop %v344
        %v407 = vtanh.pop %v349
        %v408 = vtanh.pop %v354
        %v409 = vtanh.pop %v359
        %v410 = vtanh.pop %v364
        %v411 = vtanh.pop %v369
        %v412 = vtanh.pop %v374
        %v413 = vtanh.pop %v379
        %v414 = vtanh.pop %v384
        %v415 = vtanh.pop %v389
        %v416 = vtanh.pop %v394
        %v417 = vtanh.pop %v399
        %v418 = vmul.f32 %v402, 5.0
        %v419 = vmul.f32 %v403, 5.0
        %v420 = vmul.f32 %v404, 5.0
        %v421 = vmul.f32 %v405, 5.0
        %v422 = vmul.f32 %v406, 5.0
        %v423 = vmul.f32 %v407, 5.0
        %v424 = vmul.f32 %v408, 5.0
        %v425 = vmul.f32 %v409, 5.0
        %v426 = vmul.f32 %v410, 5.0
        %v427 = vmul.f32 %v411, 5.0
        %v428 = vmul.f32 %v412, 5.0
        %v429 = vmul.f32 %v413, 5.0
        %v430 = vmul.f32 %v414, 5.0
        %v431 = vmul.f32 %v415, 5.0
        %v432 = vmul.f32 %v416, 5.0
        %v433 = vmul.f32 %v417, 5.0
        %v434 = vld [vmem:[%s3] sm:$0xff]
        %v435 = vld [vmem:[%s3 + $0x8] sm:$0xff]
        %v436 = vld [vmem:[%s3 + $0x10] sm:$0xff]
        %v437 = vld [vmem:[%s3 + $0x18] sm:$0xff]
        %v438 = vld [vmem:[%s3 + $0x20] sm:$0xff]
        %v439 = vld [vmem:[%s3 + $0x28] sm:$0xff]
        %v440 = vld [vmem:[%s3 + $0x30] sm:$0xff]
        %v441 = vld [vmem:[%s3 + $0x38] sm:$0xff]
        %v442 = vld [vmem:[%s3 + $0x40] sm:$0xff]
        %v443 = vld [vmem:[%s3 + $0x48] sm:$0xff]
        %v444 = vld [vmem:[%s3 + $0x50] sm:$0xff]
        %v445 = vld [vmem:[%s3 + $0x58] sm:$0xff]
        %v446 = vld [vmem:[%s3 + $0x60] sm:$0xff]
        %v447 = vld [vmem:[%s3 + $0x68] sm:$0xff]
        %v448 = vld [vmem:[%s3 + $0x70] sm:$0xff]
        %v449 = vld [vmem:[%s3 + $0x78] sm:$0xff]
        %450 = vmatprep.subr.mxu0 0.0
        %451 = vmatpush1.msra.mxu0 %v449
        %452 = vmatprep.subr.mxu0 0.0
        %453 = vmatpush1.msra.mxu0 %v448
        %454 = vmatprep.subr.mxu0 0.0
        %455 = vmatpush1.msra.mxu0 %v447
        %456 = vmatprep.subr.mxu0 0.0
        %457 = vmatpush1.msra.mxu0 %v446
        %458 = vmatprep.subr.mxu0 0.0
        %459 = vmatpush1.msra.mxu0 %v445
        %460 = vmatprep.subr.mxu0 0.0
        %461 = vmatpush1.msra.mxu0 %v444
        %462 = vmatprep.subr.mxu0 0.0
        %463 = vmatpush1.msra.mxu0 %v443
        %464 = vmatprep.subr.mxu0 0.0
        %465 = vmatpush1.msra.mxu0 %v442
        %466 = vmatprep.subr.mxu0 0.0
        %467 = vmatpush1.msra.mxu0 %v441
        %468 = vmatprep.subr.mxu0 0.0
        %469 = vmatpush1.msra.mxu0 %v440
        %470 = vmatprep.subr.mxu0 0.0
        %471 = vmatpush1.msra.mxu0 %v439
        %472 = vmatprep.subr.mxu0 0.0
        %473 = vmatpush1.msra.mxu0 %v438
        %474 = vmatprep.subr.mxu0 0.0
        %475 = vmatpush1.msra.mxu0 %v437
        %476 = vmatprep.subr.mxu0 0.0
        %477 = vmatpush1.msra.mxu0 %v436
        %478 = vmatprep.subr.mxu0 0.0
        %479 = vmatpush1.msra.mxu0 %v435
        %480 = vmatprep.subr.mxu0 0.0
        %481 = vmatpush1.msra.mxu0 %v434
        %482 = vmatprep.subr.mxu0 0.0
        %483 = vmatpush2.msra.mxu0 0.0
        %484 = vmatprep.subr.mxu0 0.0
        %485 = vmatpush2.msra.mxu0 0.0
        %486 = vmatprep.subr.mxu0 0.0
        %487 = vmatpush2.msra.mxu0 0.0
        %488 = vmatprep.subr.mxu0 0.0
        %489 = vmatpush2.msra.mxu0 0.0
        %490 = vmatprep.subr.mxu0 0.0
        %491 = vmatpush2.msra.mxu0 0.0
        %492 = vmatprep.subr.mxu0 0.0
        %493 = vmatpush2.msra.mxu0 0.0
        %494 = vmatprep.subr.mxu0 0.0
        %495 = vmatpush2.msra.mxu0 0.0
        %496 = vmatprep.subr.mxu0 0.0
        %497 = vmatpush2.msra.mxu0 0.0
        %498 = vmatprep.subr.mxu0 0.0
        %499 = vmatpush2.msra.mxu0 0.0
        %500 = vmatprep.subr.mxu0 0.0
        %501 = vmatpush2.msra.mxu0 0.0
        %502 = vmatprep.subr.mxu0 0.0
        %503 = vmatpush2.msra.mxu0 0.0
        %504 = vmatprep.subr.mxu0 0.0
        %505 = vmatpush2.msra.mxu0 0.0
        %506 = vmatprep.subr.mxu0 0.0
        %507 = vmatpush2.msra.mxu0 0.0
        %508 = vmatprep.subr.mxu0 0.0
        %509 = vmatpush2.msra.mxu0 0.0
        %510 = vmatprep.subr.mxu0 0.0
        %511 = vmatpush2.msra.mxu0 0.0
        %512 = vmatprep.subr.mxu0 0.0
        %513 = vmatpush2.msra.mxu0 0.0
        %514 = vmatprep.mubr.f32.mxu0 0.0
        %515 = vmatmul.mubr.f32.gmra.mxu0 %v324
        %v516 = vpop.f32.mrf.mxu0
        %v517 = vadd.f32 0.0, %v516
        %v518 = vpop.f32.mrf.mxu0
        %519 = vmatprep.mubr.f32.mxu0 0.0
        %520 = vmatmul.mubr.f32.gmra.mxu0 %v329
        %v521 = vpop.f32.mrf.mxu0
        %v522 = vadd.f32 0.0, %v521
        %v523 = vpop.f32.mrf.mxu0
        %524 = vmatprep.mubr.f32.mxu0 0.0
        %525 = vmatmul.mubr.f32.gmra.mxu0 %v334
        %v526 = vpop.f32.mrf.mxu0
        %v527 = vadd.f32 0.0, %v526
        %v528 = vpop.f32.mrf.mxu0
        %529 = vmatprep.mubr.f32.mxu0 0.0
        %530 = vmatmul.mubr.f32.gmra.mxu0 %v339
        %v531 = vpop.f32.mrf.mxu0
        %v532 = vadd.f32 0.0, %v531
        %v533 = vpop.f32.mrf.mxu0
        %534 = vmatprep.mubr.f32.mxu0 0.0
        %535 = vmatmul.mubr.f32.gmra.mxu0 %v344
        %v536 = vpop.f32.mrf.mxu0
        %v537 = vadd.f32 0.0, %v536
        %v538 = vpop.f32.mrf.mxu0
        %539 = vmatprep.mubr.f32.mxu0 0.0
        %540 = vmatmul.mubr.f32.gmra.mxu0 %v349
        %v541 = vpop.f32.mrf.mxu0
        %v542 = vadd.f32 0.0, %v541
        %v543 = vpop.f32.mrf.mxu0
        %544 = vmatprep.mubr.f32.mxu0 0.0
        %545 = vmatmul.mubr.f32.gmra.mxu0 %v354
        %v546 = vpop.f32.mrf.mxu0
        %v547 = vadd.f32 0.0, %v546
        %v548 = vpop.f32.mrf.mxu0
        %549 = vmatprep.mubr.f32.mxu0 0.0
        %550 = vmatmul.mubr.f32.gmra.mxu0 %v359
        %v551 = vpop.f32.mrf.mxu0
        %v552 = vadd.f32 0.0, %v551
        %v553 = vpop.f32.mrf.mxu0
        %554 = vmatprep.mubr.f32.mxu0 0.0
        %555 = vmatmul.mubr.f32.gmra.mxu0 %v364
        %v556 = vpop.f32.mrf.mxu0
        %v557 = vadd.f32 0.0, %v556
        %v558 = vpop.f32.mrf.mxu0
        %559 = vmatprep.mubr.f32.mxu0 0.0
        %560 = vmatmul.mubr.f32.gmra.mxu0 %v369
        %v561 = vpop.f32.mrf.mxu0
        %v562 = vadd.f32 0.0, %v561
        %v563 = vpop.f32.mrf.mxu0
        %564 = vmatprep.mubr.f32.mxu0 0.0
        %565 = vmatmul.mubr.f32.gmra.mxu0 %v374
        %v566 = vpop.f32.mrf.mxu0
        %v567 = vadd.f32 0.0, %v566
        %v568 = vpop.f32.mrf.mxu0
        %569 = vmatprep.mubr.f32.mxu0 0.0
        %570 = vmatmul.mubr.f32.gmra.mxu0 %v379
        %v571 = vpop.f32.mrf.mxu0
        %v572 = vadd.f32 0.0, %v571
        %v573 = vpop.f32.mrf.mxu0
        %574 = vmatprep.mubr.f32.mxu0 0.0
        %575 = vmatmul.mubr.f32.gmra.mxu0 %v384
        %v576 = vpop.f32.mrf.mxu0
        %v577 = vadd.f32 0.0, %v576
        %v578 = vpop.f32.mrf.mxu0
        %579 = vmatprep.mubr.f32.mxu0 0.0
        %580 = vmatmul.mubr.f32.gmra.mxu0 %v389
        %v581 = vpop.f32.mrf.mxu0
        %v582 = vadd.f32 0.0, %v581
        %v583 = vpop.f32.mrf.mxu0
        %584 = vmatprep.mubr.f32.mxu0 0.0
        %585 = vmatmul.mubr.f32.gmra.mxu0 %v394
        %v586 = vpop.f32.mrf.mxu0
        %v587 = vadd.f32 0.0, %v586
        %v588 = vpop.f32.mrf.mxu0
        %589 = vmatprep.mubr.f32.mxu0 0.0
        %590 = vmatmul.mubr.f32.gmra.mxu0 %v399
        %v591 = vpop.f32.mrf.mxu0
        %v592 = vadd.f32 0.0, %v591
        %v593 = vpop.f32.mrf.mxu0
        %594 = vdwg.mxu0
        %v595 = vlaneseq
        %v596 = vand.u32 %v595, 127
        %vm597 = vcmp.lt.s32.totalorder %v596, 40
        %vm598 = vcmp.ge.s32.totalorder %v596, 40
        %vm599 = vcmp.lt.s32.totalorder %v596, 46
        %vm600 = vmand %vm598, %vm599
        %vm601 = vcmp.lt.s32.totalorder %v596, 42
        %vm602 = vmand %vm598, %vm601
        %vm603 = vcmp.ge.s32.totalorder %v596, 42
        %vm604 = vcmp.lt.s32.totalorder %v596, 44
        %vm605 = vmand %vm603, %vm604
        %vm606 = vcmp.ge.s32.totalorder %v596, 44
        %vm607 = vcmp.lt.s32.totalorder %v596, 45
        %vm608 = vmand %vm606, %vm607
        %vm609 = vcmp.ge.s32.totalorder %v596, 45
        %vm610 = vmand %vm609, %vm599
        %v611 = vsel %vm602, %v517, -1e+30
        %v612 = vsel %vm602, %v522, -1e+30
        %v613 = vsel %vm602, %v527, -1e+30
        %v614 = vsel %vm602, %v532, -1e+30
        %v615 = vsel %vm602, %v537, -1e+30
        %v616 = vsel %vm602, %v542, -1e+30
        %v617 = vsel %vm602, %v547, -1e+30
        %v618 = vsel %vm602, %v552, -1e+30
        %v619 = vsel %vm602, %v557, -1e+30
        %v620 = vsel %vm602, %v562, -1e+30
        %v621 = vsel %vm602, %v567, -1e+30
        %v622 = vsel %vm602, %v572, -1e+30
        %v623 = vsel %vm602, %v577, -1e+30
        %v624 = vsel %vm602, %v582, -1e+30
        %v625 = vsel %vm602, %v587, -1e+30
        %v626 = vsel %vm602, %v592, -1e+30
        %627 = vmax.xlane.f32.xlu0 %v611
        %v628 = vpop.xlane.xlu0 %627
        %629 = vmax.xlane.f32.xlu0 %v612
        %v630 = vpop.xlane.xlu0 %629
        %631 = vmax.xlane.f32.xlu0 %v613
        %v632 = vpop.xlane.xlu0 %631
        %633 = vmax.xlane.f32.xlu0 %v614
        %v634 = vpop.xlane.xlu0 %633
        %635 = vmax.xlane.f32.xlu0 %v615
        %v636 = vpop.xlane.xlu0 %635
        %637 = vmax.xlane.f32.xlu0 %v616
        %v638 = vpop.xlane.xlu0 %637
        %639 = vmax.xlane.f32.xlu0 %v617
        %v640 = vpop.xlane.xlu0 %639
        %641 = vmax.xlane.f32.xlu0 %v618
        %v642 = vpop.xlane.xlu0 %641
        %643 = vmax.xlane.f32.xlu0 %v619
        %v644 = vpop.xlane.xlu0 %643
        %645 = vmax.xlane.f32.xlu0 %v620
        %v646 = vpop.xlane.xlu0 %645
        %647 = vmax.xlane.f32.xlu0 %v621
        %v648 = vpop.xlane.xlu0 %647
        %649 = vmax.xlane.f32.xlu0 %v622
        %v650 = vpop.xlane.xlu0 %649
        %651 = vmax.xlane.f32.xlu0 %v623
        %v652 = vpop.xlane.xlu0 %651
        %653 = vmax.xlane.f32.xlu0 %v624
        %v654 = vpop.xlane.xlu0 %653
        %655 = vmax.xlane.f32.xlu0 %v625
        %v656 = vpop.xlane.xlu0 %655
        %657 = vmax.xlane.f32.xlu0 %v626
        %v658 = vpop.xlane.xlu0 %657
        %v659 = vsel %vm602, %v628, 0.0
        %v660 = vsel %vm602, %v630, 0.0
        %v661 = vsel %vm602, %v632, 0.0
        %v662 = vsel %vm602, %v634, 0.0
        %v663 = vsel %vm602, %v636, 0.0
        %v664 = vsel %vm602, %v638, 0.0
        %v665 = vsel %vm602, %v640, 0.0
        %v666 = vsel %vm602, %v642, 0.0
        %v667 = vsel %vm602, %v644, 0.0
        %v668 = vsel %vm602, %v646, 0.0
        %v669 = vsel %vm602, %v648, 0.0
        %v670 = vsel %vm602, %v650, 0.0
        %v671 = vsel %vm602, %v652, 0.0
        %v672 = vsel %vm602, %v654, 0.0
        %v673 = vsel %vm602, %v656, 0.0
        %v674 = vsel %vm602, %v658, 0.0
        %v675 = vsel %vm605, %v517, -1e+30
        %v676 = vsel %vm605, %v522, -1e+30
        %v677 = vsel %vm605, %v527, -1e+30
        %v678 = vsel %vm605, %v532, -1e+30
        %v679 = vsel %vm605, %v537, -1e+30
        %v680 = vsel %vm605, %v542, -1e+30
        %v681 = vsel %vm605, %v547, -1e+30
        %v682 = vsel %vm605, %v552, -1e+30
        %v683 = vsel %vm605, %v557, -1e+30
        %v684 = vsel %vm605, %v562, -1e+30
        %v685 = vsel %vm605, %v567, -1e+30
        %v686 = vsel %vm605, %v572, -1e+30
        %v687 = vsel %vm605, %v577, -1e+30
        %v688 = vsel %vm605, %v582, -1e+30
        %v689 = vsel %vm605, %v587, -1e+30
        %v690 = vsel %vm605, %v592, -1e+30
        %691 = vmax.xlane.f32.xlu0 %v675
        %v692 = vpop.xlane.xlu0 %691
        %693 = vmax.xlane.f32.xlu0 %v676
        %v694 = vpop.xlane.xlu0 %693
        %695 = vmax.xlane.f32.xlu0 %v677
        %v696 = vpop.xlane.xlu0 %695
        %697 = vmax.xlane.f32.xlu0 %v678
        %v698 = vpop.xlane.xlu0 %697
        %699 = vmax.xlane.f32.xlu0 %v679
        %v700 = vpop.xlane.xlu0 %699
        %701 = vmax.xlane.f32.xlu0 %v680
        %v702 = vpop.xlane.xlu0 %701
        %703 = vmax.xlane.f32.xlu0 %v681
        %v704 = vpop.xlane.xlu0 %703
        %705 = vmax.xlane.f32.xlu0 %v682
        %v706 = vpop.xlane.xlu0 %705
        %707 = vmax.xlane.f32.xlu0 %v683
        %v708 = vpop.xlane.xlu0 %707
        %709 = vmax.xlane.f32.xlu0 %v684
        %v710 = vpop.xlane.xlu0 %709
        %711 = vmax.xlane.f32.xlu0 %v685
        %v712 = vpop.xlane.xlu0 %711
        %713 = vmax.xlane.f32.xlu0 %v686
        %v714 = vpop.xlane.xlu0 %713
        %715 = vmax.xlane.f32.xlu0 %v687
        %v716 = vpop.xlane.xlu0 %715
        %717 = vmax.xlane.f32.xlu0 %v688
        %v718 = vpop.xlane.xlu0 %717
        %719 = vmax.xlane.f32.xlu0 %v689
        %v720 = vpop.xlane.xlu0 %719
        %721 = vmax.xlane.f32.xlu0 %v690
        %v722 = vpop.xlane.xlu0 %721
        %v723 = vsel %vm605, %v692, %v659
        %v724 = vsel %vm605, %v694, %v660
        %v725 = vsel %vm605, %v696, %v661
        %v726 = vsel %vm605, %v698, %v662
        %v727 = vsel %vm605, %v700, %v663
        %v728 = vsel %vm605, %v702, %v664
        %v729 = vsel %vm605, %v704, %v665
        %v730 = vsel %vm605, %v706, %v666
        %v731 = vsel %vm605, %v708, %v667
        %v732 = vsel %vm605, %v710, %v668
        %v733 = vsel %vm605, %v712, %v669
        %v734 = vsel %vm605, %v714, %v670
        %v735 = vsel %vm605, %v716, %v671
        %v736 = vsel %vm605, %v718, %v672
        %v737 = vsel %vm605, %v720, %v673
        %v738 = vsel %vm605, %v722, %v674
        %v739 = vsel %vm608, %v517, -1e+30
        %v740 = vsel %vm608, %v522, -1e+30
        %v741 = vsel %vm608, %v527, -1e+30
        %v742 = vsel %vm608, %v532, -1e+30
        %v743 = vsel %vm608, %v537, -1e+30
        %v744 = vsel %vm608, %v542, -1e+30
        %v745 = vsel %vm608, %v547, -1e+30
        %v746 = vsel %vm608, %v552, -1e+30
        %v747 = vsel %vm608, %v557, -1e+30
        %v748 = vsel %vm608, %v562, -1e+30
        %v749 = vsel %vm608, %v567, -1e+30
        %v750 = vsel %vm608, %v572, -1e+30
        %v751 = vsel %vm608, %v577, -1e+30
        %v752 = vsel %vm608, %v582, -1e+30
        %v753 = vsel %vm608, %v587, -1e+30
        %v754 = vsel %vm608, %v592, -1e+30
        %755 = vmax.xlane.f32.xlu0 %v739
        %v756 = vpop.xlane.xlu0 %755
        %757 = vmax.xlane.f32.xlu0 %v740
        %v758 = vpop.xlane.xlu0 %757
        %759 = vmax.xlane.f32.xlu0 %v741
        %v760 = vpop.xlane.xlu0 %759
        %761 = vmax.xlane.f32.xlu0 %v742
        %v762 = vpop.xlane.xlu0 %761
        %763 = vmax.xlane.f32.xlu0 %v743
        %v764 = vpop.xlane.xlu0 %763
        %765 = vmax.xlane.f32.xlu0 %v744
        %v766 = vpop.xlane.xlu0 %765
        %767 = vmax.xlane.f32.xlu0 %v745
        %v768 = vpop.xlane.xlu0 %767
        %769 = vmax.xlane.f32.xlu0 %v746
        %v770 = vpop.xlane.xlu0 %769
        %771 = vmax.xlane.f32.xlu0 %v747
        %v772 = vpop.xlane.xlu0 %771
        %773 = vmax.xlane.f32.xlu0 %v748
        %v774 = vpop.xlane.xlu0 %773
        %775 = vmax.xlane.f32.xlu0 %v749
        %v776 = vpop.xlane.xlu0 %775
        %777 = vmax.xlane.f32.xlu0 %v750
        %v778 = vpop.xlane.xlu0 %777
        %779 = vmax.xlane.f32.xlu0 %v751
        %v780 = vpop.xlane.xlu0 %779
        %781 = vmax.xlane.f32.xlu0 %v752
        %v782 = vpop.xlane.xlu0 %781
        %783 = vmax.xlane.f32.xlu0 %v753
        %v784 = vpop.xlane.xlu0 %783
        %785 = vmax.xlane.f32.xlu0 %v754
        %v786 = vpop.xlane.xlu0 %785
        %v787 = vsel %vm608, %v756, %v723
        %v788 = vsel %vm608, %v758, %v724
        %v789 = vsel %vm608, %v760, %v725
        %v790 = vsel %vm608, %v762, %v726
        %v791 = vsel %vm608, %v764, %v727
        %v792 = vsel %vm608, %v766, %v728
        %v793 = vsel %vm608, %v768, %v729
        %v794 = vsel %vm608, %v770, %v730
        %v795 = vsel %vm608, %v772, %v731
        %v796 = vsel %vm608, %v774, %v732
        %v797 = vsel %vm608, %v776, %v733
        %v798 = vsel %vm608, %v778, %v734
        %v799 = vsel %vm608, %v780, %v735
        %v800 = vsel %vm608, %v782, %v736
        %v801 = vsel %vm608, %v784, %v737
        %v802 = vsel %vm608, %v786, %v738
        %v803 = vsel %vm610, %v517, -1e+30
        %v804 = vsel %vm610, %v522, -1e+30
        %v805 = vsel %vm610, %v527, -1e+30
        %v806 = vsel %vm610, %v532, -1e+30
        %v807 = vsel %vm610, %v537, -1e+30
        %v808 = vsel %vm610, %v542, -1e+30
        %v809 = vsel %vm610, %v547, -1e+30
        %v810 = vsel %vm610, %v552, -1e+30
        %v811 = vsel %vm610, %v557, -1e+30
        %v812 = vsel %vm610, %v562, -1e+30
        %v813 = vsel %vm610, %v567, -1e+30
        %v814 = vsel %vm610, %v572, -1e+30
        %v815 = vsel %vm610, %v577, -1e+30
        %v816 = vsel %vm610, %v582, -1e+30
        %v817 = vsel %vm610, %v587, -1e+30
        %v818 = vsel %vm610, %v592, -1e+30
        %819 = vmax.xlane.f32.xlu0 %v803
        %v820 = vpop.xlane.xlu0 %819
        %821 = vmax.xlane.f32.xlu0 %v804
        %v822 = vpop.xlane.xlu0 %821
        %823 = vmax.xlane.f32.xlu0 %v805
        %v824 = vpop.xlane.xlu0 %823
        %825 = vmax.xlane.f32.xlu0 %v806
        %v826 = vpop.xlane.xlu0 %825
        %827 = vmax.xlane.f32.xlu0 %v807
        %v828 = vpop.xlane.xlu0 %827
        %829 = vmax.xlane.f32.xlu0 %v808
        %v830 = vpop.xlane.xlu0 %829
        %831 = vmax.xlane.f32.xlu0 %v809
        %v832 = vpop.xlane.xlu0 %831
        %833 = vmax.xlane.f32.xlu0 %v810
        %v834 = vpop.xlane.xlu0 %833
        %835 = vmax.xlane.f32.xlu0 %v811
        %v836 = vpop.xlane.xlu0 %835
        %837 = vmax.xlane.f32.xlu0 %v812
        %v838 = vpop.xlane.xlu0 %837
        %839 = vmax.xlane.f32.xlu0 %v813
        %v840 = vpop.xlane.xlu0 %839
        %841 = vmax.xlane.f32.xlu0 %v814
        %v842 = vpop.xlane.xlu0 %841
        %843 = vmax.xlane.f32.xlu0 %v815
        %v844 = vpop.xlane.xlu0 %843
        %845 = vmax.xlane.f32.xlu0 %v816
        %v846 = vpop.xlane.xlu0 %845
        %847 = vmax.xlane.f32.xlu0 %v817
        %v848 = vpop.xlane.xlu0 %847
        %849 = vmax.xlane.f32.xlu0 %v818
        %v850 = vpop.xlane.xlu0 %849
        %v851 = vsel %vm610, %v820, %v787
        %v852 = vsel %vm610, %v822, %v788
        %v853 = vsel %vm610, %v824, %v789
        %v854 = vsel %vm610, %v826, %v790
        %v855 = vsel %vm610, %v828, %v791
        %v856 = vsel %vm610, %v830, %v792
        %v857 = vsel %vm610, %v832, %v793
        %v858 = vsel %vm610, %v834, %v794
        %v859 = vsel %vm610, %v836, %v795
        %v860 = vsel %vm610, %v838, %v796
        %v861 = vsel %vm610, %v840, %v797
        %v862 = vsel %vm610, %v842, %v798
        %v863 = vsel %vm610, %v844, %v799
        %v864 = vsel %vm610, %v846, %v800
        %v865 = vsel %vm610, %v848, %v801
        %v866 = vsel %vm610, %v850, %v802
        %v867 = vsub.f32 %v517, %v851
        %v868 = vsub.f32 %v522, %v852
        %v869 = vsub.f32 %v527, %v853
        %v870 = vsub.f32 %v532, %v854
        %v871 = vsub.f32 %v537, %v855
        %v872 = vsub.f32 %v542, %v856
        %v873 = vsub.f32 %v547, %v857
        %v874 = vsub.f32 %v552, %v858
        %v875 = vsub.f32 %v557, %v859
        %v876 = vsub.f32 %v562, %v860
        %v877 = vsub.f32 %v567, %v861
        %v878 = vsub.f32 %v572, %v862
        %v879 = vsub.f32 %v577, %v863
        %v880 = vsub.f32 %v582, %v864
        %v881 = vsub.f32 %v587, %v865
        %v882 = vsub.f32 %v592, %v866
        %v883 = vsel %vm600, %v867, 0.0
        %v884 = vsel %vm600, %v868, 0.0
        %v885 = vsel %vm600, %v869, 0.0
        %v886 = vsel %vm600, %v870, 0.0
        %v887 = vsel %vm600, %v871, 0.0
        %v888 = vsel %vm600, %v872, 0.0
        %v889 = vsel %vm600, %v873, 0.0
        %v890 = vsel %vm600, %v874, 0.0
        %v891 = vsel %vm600, %v875, 0.0
        %v892 = vsel %vm600, %v876, 0.0
        %v893 = vsel %vm600, %v877, 0.0
        %v894 = vsel %vm600, %v878, 0.0
        %v895 = vsel %vm600, %v879, 0.0
        %v896 = vsel %vm600, %v880, 0.0
        %v897 = vsel %vm600, %v881, 0.0
        %v898 = vsel %vm600, %v882, 0.0
        %v899 = vmul.f32 %v883, 1.442695
        %v900 = vpow.pop %v899
        %v901 = vmul.f32 %v884, 1.442695
        %v902 = vpow.pop %v901
        %v903 = vmul.f32 %v885, 1.442695
        %v904 = vpow.pop %v903
        %v905 = vmul.f32 %v886, 1.442695
        %v906 = vpow.pop %v905
        %v907 = vmul.f32 %v887, 1.442695
        %v908 = vpow.pop %v907
        %v909 = vmul.f32 %v888, 1.442695
        %v910 = vpow.pop %v909
        %v911 = vmul.f32 %v889, 1.442695
        %v912 = vpow.pop %v911
        %v913 = vmul.f32 %v890, 1.442695
        %v914 = vpow.pop %v913
        %v915 = vmul.f32 %v891, 1.442695
        %v916 = vpow.pop %v915
        %v917 = vmul.f32 %v892, 1.442695
        %v918 = vpow.pop %v917
        %v919 = vmul.f32 %v893, 1.442695
        %v920 = vpow.pop %v919
        %v921 = vmul.f32 %v894, 1.442695
        %v922 = vpow.pop %v921
        %v923 = vmul.f32 %v895, 1.442695
        %v924 = vpow.pop %v923
        %v925 = vmul.f32 %v896, 1.442695
        %v926 = vpow.pop %v925
        %v927 = vmul.f32 %v897, 1.442695
        %v928 = vpow.pop %v927
        %v929 = vmul.f32 %v898, 1.442695
        %v930 = vpow.pop %v929
        %v931 = vsel %vm600, %v900, 0.0
        %v932 = vsel %vm600, %v902, 0.0
        %v933 = vsel %vm600, %v904, 0.0
        %v934 = vsel %vm600, %v906, 0.0
        %v935 = vsel %vm600, %v908, 0.0
        %v936 = vsel %vm600, %v910, 0.0
        %v937 = vsel %vm600, %v912, 0.0
        %v938 = vsel %vm600, %v914, 0.0
        %v939 = vsel %vm600, %v916, 0.0
        %v940 = vsel %vm600, %v918, 0.0
        %v941 = vsel %vm600, %v920, 0.0
        %v942 = vsel %vm600, %v922, 0.0
        %v943 = vsel %vm600, %v924, 0.0
        %v944 = vsel %vm600, %v926, 0.0
        %v945 = vsel %vm600, %v928, 0.0
        %v946 = vsel %vm600, %v930, 0.0
        %v947 = vsel %vm602, %v931, 0.0
        %v948 = vsel %vm602, %v932, 0.0
        %v949 = vsel %vm602, %v933, 0.0
        %v950 = vsel %vm602, %v934, 0.0
        %v951 = vsel %vm602, %v935, 0.0
        %v952 = vsel %vm602, %v936, 0.0
        %v953 = vsel %vm602, %v937, 0.0
        %v954 = vsel %vm602, %v938, 0.0
        %v955 = vsel %vm602, %v939, 0.0
        %v956 = vsel %vm602, %v940, 0.0
        %v957 = vsel %vm602, %v941, 0.0
        %v958 = vsel %vm602, %v942, 0.0
        %v959 = vsel %vm602, %v943, 0.0
        %v960 = vsel %vm602, %v944, 0.0
        %v961 = vsel %vm602, %v945, 0.0
        %v962 = vsel %vm602, %v946, 0.0
        %963 = vadd.xlane.f32.xlu0 %v947
        %v964 = vpop.xlane.xlu0 %963
        %965 = vadd.xlane.f32.xlu0 %v948
        %v966 = vpop.xlane.xlu0 %965
        %967 = vadd.xlane.f32.xlu0 %v949
        %v968 = vpop.xlane.xlu0 %967
        %969 = vadd.xlane.f32.xlu0 %v950
        %v970 = vpop.xlane.xlu0 %969
        %971 = vadd.xlane.f32.xlu0 %v951
        %v972 = vpop.xlane.xlu0 %971
        %973 = vadd.xlane.f32.xlu0 %v952
        %v974 = vpop.xlane.xlu0 %973
        %975 = vadd.xlane.f32.xlu0 %v953
        %v976 = vpop.xlane.xlu0 %975
        %977 = vadd.xlane.f32.xlu0 %v954
        %v978 = vpop.xlane.xlu0 %977
        %979 = vadd.xlane.f32.xlu0 %v955
        %v980 = vpop.xlane.xlu0 %979
        %981 = vadd.xlane.f32.xlu0 %v956
        %v982 = vpop.xlane.xlu0 %981
        %983 = vadd.xlane.f32.xlu0 %v957
        %v984 = vpop.xlane.xlu0 %983
        %985 = vadd.xlane.f32.xlu0 %v958
        %v986 = vpop.xlane.xlu0 %985
        %987 = vadd.xlane.f32.xlu0 %v959
        %v988 = vpop.xlane.xlu0 %987
        %989 = vadd.xlane.f32.xlu0 %v960
        %v990 = vpop.xlane.xlu0 %989
        %991 = vadd.xlane.f32.xlu0 %v961
        %v992 = vpop.xlane.xlu0 %991
        %993 = vadd.xlane.f32.xlu0 %v962
        %v994 = vpop.xlane.xlu0 %993
        %v995 = vsel %vm602, %v964, 1.0
        %v996 = vsel %vm602, %v966, 1.0
        %v997 = vsel %vm602, %v968, 1.0
        %v998 = vsel %vm602, %v970, 1.0
        %v999 = vsel %vm602, %v972, 1.0
        %v1000 = vsel %vm602, %v974, 1.0
        %v1001 = vsel %vm602, %v976, 1.0
        %v1002 = vsel %vm602, %v978, 1.0
        %v1003 = vsel %vm602, %v980, 1.0
        %v1004 = vsel %vm602, %v982, 1.0
        %v1005 = vsel %vm602, %v984, 1.0
        %v1006 = vsel %vm602, %v986, 1.0
        %v1007 = vsel %vm602, %v988, 1.0
        %v1008 = vsel %vm602, %v990, 1.0
        %v1009 = vsel %vm602, %v992, 1.0
        %v1010 = vsel %vm602, %v994, 1.0
        %v1011 = vsel %vm605, %v931, 0.0
        %v1012 = vsel %vm605, %v932, 0.0
        %v1013 = vsel %vm605, %v933, 0.0
        %v1014 = vsel %vm605, %v934, 0.0
        %v1015 = vsel %vm605, %v935, 0.0
        %v1016 = vsel %vm605, %v936, 0.0
        %v1017 = vsel %vm605, %v937, 0.0
        %v1018 = vsel %vm605, %v938, 0.0
        %v1019 = vsel %vm605, %v939, 0.0
        %v1020 = vsel %vm605, %v940, 0.0
        %v1021 = vsel %vm605, %v941, 0.0
        %v1022 = vsel %vm605, %v942, 0.0
        %v1023 = vsel %vm605, %v943, 0.0
        %v1024 = vsel %vm605, %v944, 0.0
        %v1025 = vsel %vm605, %v945, 0.0
        %v1026 = vsel %vm605, %v946, 0.0
        %1027 = vadd.xlane.f32.xlu0 %v1011
        %v1028 = vpop.xlane.xlu0 %1027
        %1029 = vadd.xlane.f32.xlu0 %v1012
        %v1030 = vpop.xlane.xlu0 %1029
        %1031 = vadd.xlane.f32.xlu0 %v1013
        %v1032 = vpop.xlane.xlu0 %1031
        %1033 = vadd.xlane.f32.xlu0 %v1014
        %v1034 = vpop.xlane.xlu0 %1033
        %1035 = vadd.xlane.f32.xlu0 %v1015
        %v1036 = vpop.xlane.xlu0 %1035
        %1037 = vadd.xlane.f32.xlu0 %v1016
        %v1038 = vpop.xlane.xlu0 %1037
        %1039 = vadd.xlane.f32.xlu0 %v1017
        %v1040 = vpop.xlane.xlu0 %1039
        %1041 = vadd.xlane.f32.xlu0 %v1018
        %v1042 = vpop.xlane.xlu0 %1041
        %1043 = vadd.xlane.f32.xlu0 %v1019
        %v1044 = vpop.xlane.xlu0 %1043
        %1045 = vadd.xlane.f32.xlu0 %v1020
        %v1046 = vpop.xlane.xlu0 %1045
        %1047 = vadd.xlane.f32.xlu0 %v1021
        %v1048 = vpop.xlane.xlu0 %1047
        %1049 = vadd.xlane.f32.xlu0 %v1022
        %v1050 = vpop.xlane.xlu0 %1049
        %1051 = vadd.xlane.f32.xlu0 %v1023
        %v1052 = vpop.xlane.xlu0 %1051
        %1053 = vadd.xlane.f32.xlu0 %v1024
        %v1054 = vpop.xlane.xlu0 %1053
        %1055 = vadd.xlane.f32.xlu0 %v1025
        %v1056 = vpop.xlane.xlu0 %1055
        %1057 = vadd.xlane.f32.xlu0 %v1026
        %v1058 = vpop.xlane.xlu0 %1057
        %v1059 = vsel %vm605, %v1028, %v995
        %v1060 = vsel %vm605, %v1030, %v996
        %v1061 = vsel %vm605, %v1032, %v997
        %v1062 = vsel %vm605, %v1034, %v998
        %v1063 = vsel %vm605, %v1036, %v999
        %v1064 = vsel %vm605, %v1038, %v1000
        %v1065 = vsel %vm605, %v1040, %v1001
        %v1066 = vsel %vm605, %v1042, %v1002
        %v1067 = vsel %vm605, %v1044, %v1003
        %v1068 = vsel %vm605, %v1046, %v1004
        %v1069 = vsel %vm605, %v1048, %v1005
        %v1070 = vsel %vm605, %v1050, %v1006
        %v1071 = vsel %vm605, %v1052, %v1007
        %v1072 = vsel %vm605, %v1054, %v1008
        %v1073 = vsel %vm605, %v1056, %v1009
        %v1074 = vsel %vm605, %v1058, %v1010
        %v1075 = vsel %vm608, %v931, 0.0
        %v1076 = vsel %vm608, %v932, 0.0
        %v1077 = vsel %vm608, %v933, 0.0
        %v1078 = vsel %vm608, %v934, 0.0
        %v1079 = vsel %vm608, %v935, 0.0
        %v1080 = vsel %vm608, %v936, 0.0
        %v1081 = vsel %vm608, %v937, 0.0
        %v1082 = vsel %vm608, %v938, 0.0
        %v1083 = vsel %vm608, %v939, 0.0
        %v1084 = vsel %vm608, %v940, 0.0
        %v1085 = vsel %vm608, %v941, 0.0
        %v1086 = vsel %vm608, %v942, 0.0
        %v1087 = vsel %vm608, %v943, 0.0
        %v1088 = vsel %vm608, %v944, 0.0
        %v1089 = vsel %vm608, %v945, 0.0
        %v1090 = vsel %vm608, %v946, 0.0
        %1091 = vadd.xlane.f32.xlu0 %v1075
        %v1092 = vpop.xlane.xlu0 %1091
        %1093 = vadd.xlane.f32.xlu0 %v1076
        %v1094 = vpop.xlane.xlu0 %1093
        %1095 = vadd.xlane.f32.xlu0 %v1077
        %v1096 = vpop.xlane.xlu0 %1095
        %1097 = vadd.xlane.f32.xlu0 %v1078
        %v1098 = vpop.xlane.xlu0 %1097
        %1099 = vadd.xlane.f32.xlu0 %v1079
        %v1100 = vpop.xlane.xlu0 %1099
        %1101 = vadd.xlane.f32.xlu0 %v1080
        %v1102 = vpop.xlane.xlu0 %1101
        %1103 = vadd.xlane.f32.xlu0 %v1081
        %v1104 = vpop.xlane.xlu0 %1103
        %1105 = vadd.xlane.f32.xlu0 %v1082
        %v1106 = vpop.xlane.xlu0 %1105
        %1107 = vadd.xlane.f32.xlu0 %v1083
        %v1108 = vpop.xlane.xlu0 %1107
        %1109 = vadd.xlane.f32.xlu0 %v1084
        %v1110 = vpop.xlane.xlu0 %1109
        %1111 = vadd.xlane.f32.xlu0 %v1085
        %v1112 = vpop.xlane.xlu0 %1111
        %1113 = vadd.xlane.f32.xlu0 %v1086
        %v1114 = vpop.xlane.xlu0 %1113
        %1115 = vadd.xlane.f32.xlu0 %v1087
        %v1116 = vpop.xlane.xlu0 %1115
        %1117 = vadd.xlane.f32.xlu0 %v1088
        %v1118 = vpop.xlane.xlu0 %1117
        %1119 = vadd.xlane.f32.xlu0 %v1089
        %v1120 = vpop.xlane.xlu0 %1119
        %1121 = vadd.xlane.f32.xlu0 %v1090
        %v1122 = vpop.xlane.xlu0 %1121
        %v1123 = vsel %vm608, %v1092, %v1059
        %v1124 = vsel %vm608, %v1094, %v1060
        %v1125 = vsel %vm608, %v1096, %v1061
        %v1126 = vsel %vm608, %v1098, %v1062
        %v1127 = vsel %vm608, %v1100, %v1063
        %v1128 = vsel %vm608, %v1102, %v1064
        %v1129 = vsel %vm608, %v1104, %v1065
        %v1130 = vsel %vm608, %v1106, %v1066
        %v1131 = vsel %vm608, %v1108, %v1067
        %v1132 = vsel %vm608, %v1110, %v1068
        %v1133 = vsel %vm608, %v1112, %v1069
        %v1134 = vsel %vm608, %v1114, %v1070
        %v1135 = vsel %vm608, %v1116, %v1071
        %v1136 = vsel %vm608, %v1118, %v1072
        %v1137 = vsel %vm608, %v1120, %v1073
        %v1138 = vsel %vm608, %v1122, %v1074
        %v1139 = vsel %vm610, %v931, 0.0
        %v1140 = vsel %vm610, %v932, 0.0
        %v1141 = vsel %vm610, %v933, 0.0
        %v1142 = vsel %vm610, %v934, 0.0
        %v1143 = vsel %vm610, %v935, 0.0
        %v1144 = vsel %vm610, %v936, 0.0
        %v1145 = vsel %vm610, %v937, 0.0
        %v1146 = vsel %vm610, %v938, 0.0
        %v1147 = vsel %vm610, %v939, 0.0
        %v1148 = vsel %vm610, %v940, 0.0
        %v1149 = vsel %vm610, %v941, 0.0
        %v1150 = vsel %vm610, %v942, 0.0
        %v1151 = vsel %vm610, %v943, 0.0
        %v1152 = vsel %vm610, %v944, 0.0
        %v1153 = vsel %vm610, %v945, 0.0
        %v1154 = vsel %vm610, %v946, 0.0
        %1155 = vadd.xlane.f32.xlu0 %v1139
        %v1156 = vpop.xlane.xlu0 %1155
        %1157 = vadd.xlane.f32.xlu0 %v1140
        %v1158 = vpop.xlane.xlu0 %1157
        %1159 = vadd.xlane.f32.xlu0 %v1141
        %v1160 = vpop.xlane.xlu0 %1159
        %1161 = vadd.xlane.f32.xlu0 %v1142
        %v1162 = vpop.xlane.xlu0 %1161
        %1163 = vadd.xlane.f32.xlu0 %v1143
        %v1164 = vpop.xlane.xlu0 %1163
        %1165 = vadd.xlane.f32.xlu0 %v1144
        %v1166 = vpop.xlane.xlu0 %1165
        %1167 = vadd.xlane.f32.xlu0 %v1145
        %v1168 = vpop.xlane.xlu0 %1167
        %1169 = vadd.xlane.f32.xlu0 %v1146
        %v1170 = vpop.xlane.xlu0 %1169
        %1171 = vadd.xlane.f32.xlu0 %v1147
        %v1172 = vpop.xlane.xlu0 %1171
        %1173 = vadd.xlane.f32.xlu0 %v1148
        %v1174 = vpop.xlane.xlu0 %1173
        %1175 = vadd.xlane.f32.xlu0 %v1149
        %v1176 = vpop.xlane.xlu0 %1175
        %1177 = vadd.xlane.f32.xlu0 %v1150
        %v1178 = vpop.xlane.xlu0 %1177
        %1179 = vadd.xlane.f32.xlu0 %v1151
        %v1180 = vpop.xlane.xlu0 %1179
        %1181 = vadd.xlane.f32.xlu0 %v1152
        %v1182 = vpop.xlane.xlu0 %1181
        %1183 = vadd.xlane.f32.xlu0 %v1153
        %v1184 = vpop.xlane.xlu0 %1183
        %1185 = vadd.xlane.f32.xlu0 %v1154
        %v1186 = vpop.xlane.xlu0 %1185
        %v1187 = vsel %vm610, %v1156, %v1123
        %v1188 = vsel %vm610, %v1158, %v1124
        %v1189 = vsel %vm610, %v1160, %v1125
        %v1190 = vsel %vm610, %v1162, %v1126
        %v1191 = vsel %vm610, %v1164, %v1127
        %v1192 = vsel %vm610, %v1166, %v1128
        %v1193 = vsel %vm610, %v1168, %v1129
        %v1194 = vsel %vm610, %v1170, %v1130
        %v1195 = vsel %vm610, %v1172, %v1131
        %v1196 = vsel %vm610, %v1174, %v1132
        %v1197 = vsel %vm610, %v1176, %v1133
        %v1198 = vsel %vm610, %v1178, %v1134
        %v1199 = vsel %vm610, %v1180, %v1135
        %v1200 = vsel %vm610, %v1182, %v1136
        %v1201 = vsel %vm610, %v1184, %v1137
        %v1202 = vsel %vm610, %v1186, %v1138
        %v1203 = vlog2.pop %v1187
        %v1204 = vmul.f32 %v1203, 0.6931472
        %v1205 = vlog2.pop %v1188
        %v1206 = vmul.f32 %v1205, 0.6931472
        %v1207 = vlog2.pop %v1189
        %v1208 = vmul.f32 %v1207, 0.6931472
        %v1209 = vlog2.pop %v1190
        %v1210 = vmul.f32 %v1209, 0.6931472
        %v1211 = vlog2.pop %v1191
        %v1212 = vmul.f32 %v1211, 0.6931472
        %v1213 = vlog2.pop %v1192
        %v1214 = vmul.f32 %v1213, 0.6931472
        %v1215 = vlog2.pop %v1193
        %v1216 = vmul.f32 %v1215, 0.6931472
        %v1217 = vlog2.pop %v1194
        %v1218 = vmul.f32 %v1217, 0.6931472
        %v1219 = vlog2.pop %v1195
        %v1220 = vmul.f32 %v1219, 0.6931472
        %v1221 = vlog2.pop %v1196
        %v1222 = vmul.f32 %v1221, 0.6931472
        %v1223 = vlog2.pop %v1197
        %v1224 = vmul.f32 %v1223, 0.6931472
        %v1225 = vlog2.pop %v1198
        %v1226 = vmul.f32 %v1225, 0.6931472
        %v1227 = vlog2.pop %v1199
        %v1228 = vmul.f32 %v1227, 0.6931472
        %v1229 = vlog2.pop %v1200
        %v1230 = vmul.f32 %v1229, 0.6931472
        %v1231 = vlog2.pop %v1201
        %v1232 = vmul.f32 %v1231, 0.6931472
        %v1233 = vlog2.pop %v1202
        %v1234 = vmul.f32 %v1233, 0.6931472
        %v1235 = vsub.f32 %v883, %v1204
        %v1236 = vsub.f32 %v884, %v1206
        %v1237 = vsub.f32 %v885, %v1208
        %v1238 = vsub.f32 %v886, %v1210
        %v1239 = vsub.f32 %v887, %v1212
        %v1240 = vsub.f32 %v888, %v1214
        %v1241 = vsub.f32 %v889, %v1216
        %v1242 = vsub.f32 %v890, %v1218
        %v1243 = vsub.f32 %v891, %v1220
        %v1244 = vsub.f32 %v892, %v1222
        %v1245 = vsub.f32 %v893, %v1224
        %v1246 = vsub.f32 %v894, %v1226
        %v1247 = vsub.f32 %v895, %v1228
        %v1248 = vsub.f32 %v896, %v1230
        %v1249 = vsub.f32 %v897, %v1232
        %v1250 = vsub.f32 %v898, %v1234
        %v1251 = vsel %vm597, %v418, %v1235
        %v1252 = vsel %vm597, %v419, %v1236
        %v1253 = vsel %vm597, %v420, %v1237
        %v1254 = vsel %vm597, %v421, %v1238
        %v1255 = vsel %vm597, %v422, %v1239
        %v1256 = vsel %vm597, %v423, %v1240
        %v1257 = vsel %vm597, %v424, %v1241
        %v1258 = vsel %vm597, %v425, %v1242
        %v1259 = vsel %vm597, %v426, %v1243
        %v1260 = vsel %vm597, %v427, %v1244
        %v1261 = vsel %vm597, %v428, %v1245
        %v1262 = vsel %vm597, %v429, %v1246
        %v1263 = vsel %vm597, %v430, %v1247
        %v1264 = vsel %vm597, %v431, %v1248
        %v1265 = vsel %vm597, %v432, %v1249
        %v1266 = vsel %vm597, %v433, %v1250
        %vm1267 = vcmask 375808
        %1268 = vst.msk [vmem:[%s215] sm:$0xff] %vm1267, %v1251
        %1269 = vst.msk [vmem:[%s215 + $0x8] sm:$0xff] %vm1267, %v1252
        %1270 = vst.msk [vmem:[%s215 + $0x10] sm:$0xff] %vm1267, %v1253
        %1271 = vst.msk [vmem:[%s215 + $0x18] sm:$0xff] %vm1267, %v1254
        %1272 = vst.msk [vmem:[%s215 + $0x20] sm:$0xff] %vm1267, %v1255
        %1273 = vst.msk [vmem:[%s215 + $0x28] sm:$0xff] %vm1267, %v1256
        %1274 = vst.msk [vmem:[%s215 + $0x30] sm:$0xff] %vm1267, %v1257
        %1275 = vst.msk [vmem:[%s215 + $0x38] sm:$0xff] %vm1267, %v1258
        %1276 = vst.msk [vmem:[%s215 + $0x40] sm:$0xff] %vm1267, %v1259
        %1277 = vst.msk [vmem:[%s215 + $0x48] sm:$0xff] %vm1267, %v1260
        %1278 = vst.msk [vmem:[%s215 + $0x50] sm:$0xff] %vm1267, %v1261
        %1279 = vst.msk [vmem:[%s215 + $0x58] sm:$0xff] %vm1267, %v1262
        %1280 = vst.msk [vmem:[%s215 + $0x60] sm:$0xff] %vm1267, %v1263
        %1281 = vst.msk [vmem:[%s215 + $0x68] sm:$0xff] %vm1267, %v1264
        %1282 = vst.msk [vmem:[%s215 + $0x70] sm:$0xff] %vm1267, %v1265
        %1283 = vst.msk [vmem:[%s215 + $0x78] sm:$0xff] %vm1267, %v1266
        %s1284 = sand.u32 %s118, 1
        %s1285 = scalar_lea.sflag [#allocation4], %s1284
        %s1286 = sand.u32 %s118, 1
        %s1287 = smul.addr %s1286, 128
        %s1288 = scalar_lea.vmem [#allocation5], %s1287
        // Predicated region
        $region41: #{global_norm_flipflop_catmod.1} parent=35 // pred_check
          %p1289 = pneg %p128
        $region42: #{global_norm_flipflop_catmod.1} parent=35 // pred_check_branch
          %1291 = sbr.rel (%p1289) target = $region44
        $region43: #{global_norm_flipflop_catmod.1} parent=35 // pred_region
          %s1292 = smul.u32 16, %s21
          %s1294 = ssub.s32 2048, 2048
          %1295 = vsyncadd %s1285, %s1294
          %s1296 = smul.addr %s1292, 128
          %s1297 = scalar_lea.hbm %s4, %s1296
          %s1298 = sshll.u32 %s1288, 4
          %s1299 = int_to_ptr.vmem [resolvable:$true] %s1298
          %1304 = dma.vmem_to_hbm [thread:$0]  %s1299, 2048, %s1297, %s1285, 128, 128, 8
        $region44: #{global_norm_flipflop_catmod.1} parent=35 // pred_fallthru
          _
      $region36: #{global_norm_flipflop_catmod.1} parent=5 // pred_fallthru
        _
      %p1305 = scmp.le.s32.totalorder 2, %s16
      // Predicated region
      $region45: #{global_norm_flipflop_catmod.1} parent=5 // pred_check
        %p1306 = pneg %p1305
      $region46: #{global_norm_flipflop_catmod.1} parent=5 // pred_check_branch
        %1308 = sbr.rel (%p1306) target = $region48
      $region47: #{global_norm_flipflop_catmod.1} parent=5 // pred_region
        %s1309 = ssub.s32 %s16, 2
        // Predicated region
        $region49: #{global_norm_flipflop_catmod.1} parent=47 // pred_check
          %p1310 = pneg %p134
        $region50: #{global_norm_flipflop_catmod.1} parent=47 // pred_check_branch
          %1312 = sbr.rel (%p1310) target = $region52
        $region51: #{global_norm_flipflop_catmod.1} parent=47 // pred_region
          %s1313 = sand.u32 %s119, 1
          %s1314 = scalar_lea.sflag [#allocation4], %s1313
          %s1315 = sand.u32 %s119, 1
          %s1316 = smul.addr %s1315, 128
          %s1317 = scalar_lea.vmem [#allocation5], %s1316
          %1318 = dma.done %s1314, 2048
        $region52: #{global_norm_flipflop_catmod.1} parent=47 // pred_fallthru
          _
      $region48: #{global_norm_flipflop_catmod.1} parent=5 // pred_fallthru
        _
    $region6: #{global_norm_flipflop_catmod.1} parent=1 // loop_footer
      %s20 = sadd.s32 1, %s16
    $region7: #{global_norm_flipflop_catmod.1} parent=1 // loop_footer_branch
      %15 = sbr.rel target = $region3
    $region8: #{global_norm_flipflop_catmod.1} parent=1 // loop_exit
      _
    %1319 = vsyncpa [#allocation3], 1
    %s1320 = scalar_lea.sflag [#allocation3], 1
    %1321 = vsyncpa %s1320, 1
    %1322 = vsyncpa [#allocation4], 1
    %s1323 = scalar_lea.sflag [#allocation4], 1
    %1324 = vsyncpa %s1323, 1

</llo_original>
